<compile_context>
chip_gen: v7x
topology: tpu7x:2x2x1
jax: 0.10.0
libtpu: 0.0.40
codegen_flags: <defaults>
</compile_context>

<pallas_src>
import functools

import jax
import jax.numpy as jnp
from jax.experimental import pallas as pl
from jax.experimental.pallas import tpu as pltpu


def _num_tensorcores():
    """2 batch blocks on v7x (2 TensorCores/chip), 1 on v5e/v6e."""
    try:
        kind = jax.devices()[0].device_kind.lower()
    except Exception:
        return 1
    return 2 if ("v7" in kind or "7x" in kind) else 1


def _vae_kernel(x_ref, epsw_ref,
                we1, we2, we3, we4w, wd1w, wd2, wd3w, bpack,
                out_ref, *, hidden_dim, latent_dim, out_width):
    f32, bf16 = jnp.float32, jnp.bfloat16
    H, L, W = hidden_dim, latent_dim, out_width
    L2 = 2 * L

    # biases packed row-wise: be1, be2, be3, be4(wide), bd1, bd2, bd3(wide)
    be1 = bpack[0:1, :H]
    be2 = bpack[1:2, :H]
    be3 = bpack[2:3, :H]
    be4 = bpack[3:4, :W]
    bd1 = bpack[4:5, :H]
    bd2 = bpack[5:6, :H]
    bd3 = bpack[6:7, :W]

    x = x_ref[...].astype(bf16)

    # ---- encoder (Dropout == identity in eval); bf16 MXU inputs, f32 acc ----
    h = jnp.tanh(jnp.dot(x, we1[...], preferred_element_type=f32) + be1)
    h = jnp.tanh(jnp.dot(h.astype(bf16), we2[...], preferred_element_type=f32) + be2)
    h = jnp.tanh(jnp.dot(h.astype(bf16), we3[...], preferred_element_type=f32) + be3)

    # single merged dot for the encoder head: [mu|logvar] lands in lanes
    # [0:2L) AND (duplicated columns) in lanes [W-2L:W); zeros elsewhere.
    mlvw = jnp.dot(h.astype(bf16), we4w[...], preferred_element_type=f32) + be4

    lane = jax.lax.broadcasted_iota(jnp.int32, mlvw.shape, 1)
    # keep only the low copy for the reparam math (high lanes exactly 0, so the
    # exp below stays finite on the unused lanes).
    mlv = jnp.where(lane < L2, mlvw, 0.0)

    # ---- reparameterize + first decoder layer (fused, full-width VPU ops) ---
    # epsw has eps in lanes [L:2L), zeros elsewhere.
    # g lanes [0:L) = mu, lanes [L:2L) = eps * exp(0.5*logvar), rest = 0.
    # Keep the jnp.where (do NOT turn into arithmetic masking: the unselected
    # exp branch may be inf*0=NaN and would then propagate).
    g = jnp.where(lane < L, mlv, epsw_ref[...] * jnp.exp(0.5 * mlv))

    # wd1w rows: [0:L)=Wd1, [L:2L)=Wd1, rest 0  =>  g @ wd1w == (mu+eps*std)@Wd1
    d = jnp.tanh(jnp.dot(g.astype(bf16), wd1w[...], preferred_element_type=f32) + bd1)

    # ---- rest of decoder ----
    d = jnp.tanh(jnp.dot(d.astype(bf16), wd2[...], preferred_element_type=f32) + bd2)
    # wd3w/bd3 are zero-padded to W columns -> x_hat in lanes [0:input_dim), 0 after
    xh = jnp.dot(d.astype(bf16), wd3w[...], preferred_element_type=f32) + bd3

    # single lane-dense 128-wide store: x_hat | zeros | mu|logvar
    out_ref[...] = jnp.where(lane < W - L2, xh, mlvw).astype(out_ref.dtype)


def prepare_params(params):
    """One-time parameter prep (hoist out of the per-call path).

    Returns a dict of arrays ready to be fed to vae_forward:
      bf16 weight casts, merged+lane-placed encoder head, duplicated-row
      reparam weight, zero-padded decoder output weight, packed biases.
    """
    f32, bf16 = jnp.float32, jnp.bfloat16
    input_dim, hidden_dim = params["we1"].shape
    latent_dim = params["we4"].shape[1] // 2
    L, L2 = latent_dim, 2 * latent_dim

    out_w = ((input_dim + L2 + 127) // 128) * 128      # lane-dense output width
    assert 2 * L2 <= out_w, "latent_dim too large for the output slab layout"
    bdim = ((max(hidden_dim, out_w) + 127) // 128) * 128

    # encoder head: [mu|logvar] columns placed at [0:2L) and [out_w-2L:out_w)
    we4w = jnp.zeros((hidden_dim, out_w), f32)
    we4w = we4w.at[:, :L2].set(params["we4"].astype(f32))
    we4w = we4w.at[:, out_w - L2:].set(params["we4"].astype(f32))
    be4w = jnp.zeros((out_w,), f32)
    be4w = be4w.at[:L2].set(params["be4"].astype(f32))
    be4w = be4w.at[out_w - L2:].set(params["be4"].astype(f32))

    # duplicated-row first-decoder weight, zero rows past 2L (bf16 for 1 MXU pass)
    wd1w = jnp.zeros((out_w, hidden_dim), f32)
    wd1w = wd1w.at[:L].set(params["wd1"].astype(f32))
    wd1w = wd1w.at[L:L2].set(params["wd1"].astype(f32))

    # last decoder layer zero-padded to the full output width
    wd3w = jnp.pad(params["wd3"].astype(f32), ((0, 0), (0, out_w - input_dim)))
    bd3w = jnp.pad(params["bd3"].astype(f32), (0, out_w - input_dim))

    def row(v):
        v = v.reshape(-1).astype(f32)
        return jnp.pad(v, (0, bdim - v.shape[0]))

    bpack = jnp.stack([row(params["be1"]), row(params["be2"]), row(params["be3"]),
                       row(be4w), row(params["bd1"]), row(params["bd2"]),
                       row(bd3w), jnp.zeros((bdim,), f32)])

    return {
        "we1": params["we1"].astype(bf16),
        "we2": params["we2"].astype(bf16),
        "we3": params["we3"].astype(bf16),
        "we4w": we4w.astype(bf16),
        "wd1w": wd1w.astype(bf16),
        "wd2": params["wd2"].astype(bf16),
        "wd3w": wd3w.astype(bf16),
        "bpack": bpack,
    }


def vae_forward(x, eps, prep, *, num_blocks=None):
    """Fused VAE forward. Returns (x_hat, mu, logvar).

    prep: output of prepare_params (one-time prep, kept out of this path).
    """
    f32 = jnp.float32
    B, input_dim = x.shape
    latent_dim = eps.shape[1]
    hidden_dim = prep["we1"].shape[1]
    out_w = prep["we4w"].shape[1]
    L2 = 2 * latent_dim

    if num_blocks is None:
        num_blocks = _num_tensorcores()

    # v5e/v6e (1 TC): single grid step, no batch padding, no trailing slice.
    # v7x (2 TCs): two "parallel" grid steps so both cores get work.
    # (If batch ever grows large, sweep the per-block rows upward instead.)
    if num_blocks <= 1 or B < 16:
        tb, Bp = B, B                       # full-dim block is legal even if B % 8 != 0
    else:
        tb = ((pl.cdiv(B, num_blocks) + 7) // 8) * 8
        Bp = pl.cdiv(B, tb) * tb

    xp = x.astype(f32)
    # eps placed in lanes [L:2L) of a lane-dense (Bp, out_w) slab, zeros elsewhere
    epsw = jnp.pad(eps.astype(f32), ((0, Bp - B), (latent_dim, out_w - L2)))
    if Bp != B:
        xp = jnp.pad(xp, ((0, Bp - B), (0, 0)))

    def batch_map(i):
        return (i, 0)

    def pinned_map(i):
        return (0, 0)                       # weights stay VMEM-resident

    weight_args = (prep["we1"], prep["we2"], prep["we3"], prep["we4w"],
                   prep["wd1w"], prep["wd2"], prep["wd3w"], prep["bpack"])
    in_specs = (
        [pl.BlockSpec((tb, input_dim), batch_map),
         pl.BlockSpec((tb, out_w), batch_map)]
        + [pl.BlockSpec(w.shape, pinned_map) for w in weight_args]
    )
    out_specs = pl.BlockSpec((tb, out_w), batch_map)
    out_shape = jax.ShapeDtypeStruct((Bp, out_w), f32)

    H = hidden_dim
    flops = 2 * Bp * (input_dim * H + 2 * H * H + H * out_w
                      + out_w * H + H * H + H * out_w)
    transcendentals = Bp * (5 * H + out_w)
    bytes_accessed = (4 * (xp.size + epsw.size + Bp * out_w)
                      + 2 * sum(int(w.size) for w in weight_args[:-1])
                      + 4 * int(prep["bpack"].size))

    kernel = functools.partial(
        _vae_kernel, hidden_dim=H, latent_dim=latent_dim, out_width=out_w)

    slab = pl.pallas_call(
        kernel,
        out_shape=out_shape,
        grid=(Bp // tb,),
        in_specs=in_specs,
        out_specs=out_specs,
        compiler_params=pltpu.CompilerParams(
            dimension_semantics=("parallel",)),     # shards batch across v7x's 2 TCs
        cost_estimate=pl.CostEstimate(
            flops=int(flops),
            transcendentals=int(transcendentals),
            bytes_accessed=int(bytes_accessed)),
    )(xp, epsw, *weight_args)

    if Bp != B:
        slab = slab[:B]
    x_hat = slab[:, :input_dim]
    mu = slab[:, out_w - L2: out_w - latent_dim]
    logvar = slab[:, out_w - latent_dim:]
    return x_hat, mu, logvar


def _linear_init(key, fan_in, fan_out):
    """PyTorch nn.Linear default init: U(-1/sqrt(fan_in), 1/sqrt(fan_in))."""
    kw, kb = jax.random.split(key)
    bound = 1.0 / jnp.sqrt(jnp.float32(fan_in))
    w = jax.random.uniform(kw, (fan_in, fan_out), jnp.float32, -bound, bound)
    b = jax.random.uniform(kb, (fan_out,), jnp.float32, -bound, bound)
    return w, b


def init_params(key, latent_dim, input_dim, hidden_dim):
    keys = jax.random.split(key, 7)
    p = {}
    # encoder: in -> h -> h -> h -> 2*latent  (mu | logvar)
    p["we1"], p["be1"] = _linear_init(keys[0], input_dim, hidden_dim)
    p["we2"], p["be2"] = _linear_init(keys[1], hidden_dim, hidden_dim)
    p["we3"], p["be3"] = _linear_init(keys[2], hidden_dim, hidden_dim)
    p["we4"], p["be4"] = _linear_init(keys[3], hidden_dim, 2 * latent_dim)
    # decoder: latent -> h -> h -> in
    p["wd1"], p["bd1"] = _linear_init(keys[4], latent_dim, hidden_dim)
    p["wd2"], p["bd2"] = _linear_init(keys[5], hidden_dim, hidden_dim)
    p["wd3"], p["bd3"] = _linear_init(keys[6], hidden_dim, input_dim)
    return p


def _reference(x, eps, p):
    """Pure-JAX reference emulating the kernel's bf16-input / f32-acc matmuls."""
    f32, bf16 = jnp.float32, jnp.bfloat16

    def lin(a, w, b):
        return jnp.dot(a.astype(bf16), w.astype(bf16),
                       preferred_element_type=f32) + b

    h = jnp.tanh(lin(x, p["we1"], p["be1"]))
    h = jnp.tanh(lin(h, p["we2"], p["be2"]))
    h = jnp.tanh(lin(h, p["we3"], p["be3"]))
    mlv = lin(h, p["we4"], p["be4"])
    L = eps.shape[1]
    mu, logvar = mlv[:, :L], mlv[:, L:]
    std = jnp.exp(0.5 * logvar)
    # kernel rounds mu and eps*std to bf16 separately before the first decoder dot
    d = jnp.tanh(lin(mu, p["wd1"], 0.0) + lin(eps * std, p["wd1"], 0.0) + p["bd1"])
    d = jnp.tanh(lin(d, p["wd2"], p["bd2"]))
    x_hat = lin(d, p["wd3"], p["bd3"])
    return x_hat, mu, logvar


if __name__ == "__main__":
    # Shapes implied by the original script: z = torch.randn(214, 2)
    latent_dim, input_dim, hidden_dim = 2, 16, 32
    batch = 214

    key = jax.random.PRNGKey(0)
    k_x, k_eps, k_param = jax.random.split(key, 3)

    x = jax.random.normal(k_x, (batch, input_dim), jnp.float32)
    # eps plays the role of torch.randn_like(std) — sampled outside the kernel
    # for determinism.
    eps = jax.random.normal(k_eps, (batch, latent_dim), jnp.float32)
    params = init_params(k_param, latent_dim, input_dim, hidden_dim)

    prep = prepare_params(params)            # one-time prep, outside the call path
    fwd = jax.jit(vae_forward)
    x_hat, mu, logvar = jax.block_until_ready(fwd(x, eps, prep))

    # correctness check against bf16-emulating pure-JAX reference
    rx, rm, rl = _reference(x, eps, params)
    # tolerance covers bf16 MXU inputs + EUP tanh/exp approximation deltas
    assert jnp.allclose(x_hat, rx, atol=1e-2, rtol=1e-2), "x_hat mismatch"
    assert jnp.allclose(mu, rm, atol=5e-3, rtol=5e-3), "mu mismatch"
    assert jnp.allclose(logvar, rl, atol=5e-3, rtol=5e-3), "logvar mismatch"

    print("KERNEL_OK")
</pallas_src>

<mosaic_0001>
module attributes {stable_mosaic.version = 11 : i64} {
  func.func @_vae_kernel(%arg0: i32, %arg1: memref<214x16xf32, #tpu.memory_space<vmem>>, %arg2: memref<214x128xf32, #tpu.memory_space<vmem>>, %arg3: memref<16x32xbf16, #tpu.memory_space<vmem>>, %arg4: memref<32x32xbf16, #tpu.memory_space<vmem>>, %arg5: memref<32x32xbf16, #tpu.memory_space<vmem>>, %arg6: memref<32x128xbf16, #tpu.memory_space<vmem>>, %arg7: memref<128x32xbf16, #tpu.memory_space<vmem>>, %arg8: memref<32x32xbf16, #tpu.memory_space<vmem>>, %arg9: memref<32x128xbf16, #tpu.memory_space<vmem>>, %arg10: memref<8x128xf32, #tpu.memory_space<vmem>>, %arg11: memref<214x128xf32, #tpu.memory_space<vmem>>) attributes {dimension_semantics = [#tpu.dimension_semantics<parallel>], iteration_bounds = array<i64: 1>, scalar_prefetch = 0 : i64, scratch_operands = 0 : i64, tpu.core_type = #tpu.core_type<tc>, window_params = [{transform_indices = @transform_0, window_bounds = array<i64: 214, 16>}, {transform_indices = @transform_1, window_bounds = array<i64: 214, 128>}, {pipeline_mode = #tpu.pipeline_mode<synchronous>, transform_indices = @transform_2, window_bounds = array<i64: 16, 32>}, {pipeline_mode = #tpu.pipeline_mode<synchronous>, transform_indices = @transform_3, window_bounds = array<i64: 32, 32>}, {pipeline_mode = #tpu.pipeline_mode<synchronous>, transform_indices = @transform_4, window_bounds = array<i64: 32, 32>}, {pipeline_mode = #tpu.pipeline_mode<synchronous>, transform_indices = @transform_5, window_bounds = array<i64: 32, 128>}, {pipeline_mode = #tpu.pipeline_mode<synchronous>, transform_indices = @transform_6, window_bounds = array<i64: 128, 32>}, {pipeline_mode = #tpu.pipeline_mode<synchronous>, transform_indices = @transform_7, window_bounds = array<i64: 32, 32>}, {pipeline_mode = #tpu.pipeline_mode<synchronous>, transform_indices = @transform_8, window_bounds = array<i64: 32, 128>}, {pipeline_mode = #tpu.pipeline_mode<synchronous>, transform_indices = @transform_9, window_bounds = array<i64: 8, 128>}, {transform_indices = @transform_10, window_bounds = array<i64: 214, 128>}]} {
    %c0 = arith.constant 0 : index
    %c0_0 = arith.constant 0 : index
    %0 = vector.load %arg10[%c0, %c0_0] : memref<8x128xf32, #tpu.memory_space<vmem>>, vector<1x32xf32>
    %c1 = arith.constant 1 : index
    %c0_1 = arith.constant 0 : index
    %1 = vector.load %arg10[%c1, %c0_1] : memref<8x128xf32, #tpu.memory_space<vmem>>, vector<1x32xf32>
    %c2 = arith.constant 2 : index
    %c0_2 = arith.constant 0 : index
    %2 = vector.load %arg10[%c2, %c0_2] : memref<8x128xf32, #tpu.memory_space<vmem>>, vector<1x32xf32>
    %c3 = arith.constant 3 : index
    %c0_3 = arith.constant 0 : index
    %3 = vector.load %arg10[%c3, %c0_3] : memref<8x128xf32, #tpu.memory_space<vmem>>, vector<1x128xf32>
    %c4 = arith.constant 4 : index
    %c0_4 = arith.constant 0 : index
    %4 = vector.load %arg10[%c4, %c0_4] : memref<8x128xf32, #tpu.memory_space<vmem>>, vector<1x32xf32>
    %c5 = arith.constant 5 : index
    %c0_5 = arith.constant 0 : index
    %5 = vector.load %arg10[%c5, %c0_5] : memref<8x128xf32, #tpu.memory_space<vmem>>, vector<1x32xf32>
    %c6 = arith.constant 6 : index
    %c0_6 = arith.constant 0 : index
    %6 = vector.load %arg10[%c6, %c0_6] : memref<8x128xf32, #tpu.memory_space<vmem>>, vector<1x128xf32>
    %c0_7 = arith.constant 0 : index
    %c0_8 = arith.constant 0 : index
    %7 = vector.load %arg1[%c0_7, %c0_8] : memref<214x16xf32, #tpu.memory_space<vmem>>, vector<214x16xf32>
    %8 = arith.truncf %7 : vector<214x16xf32> to vector<214x16xbf16>
    %c0_9 = arith.constant 0 : index
    %c0_10 = arith.constant 0 : index
    %9 = vector.load %arg3[%c0_9, %c0_10] : memref<16x32xbf16, #tpu.memory_space<vmem>>, vector<16x32xbf16>
    %cst = arith.constant dense<0.000000e+00> : vector<214x32xf32>
    %10 = tpu.matmul %8, %9, %cst {dimension_numbers = #tpu.dot_dimension_numbers<[1], [0], [0], [1], [0, 0, 1, 1], [], []>} : vector<214x16xbf16>, vector<16x32xbf16>, vector<214x32xf32> -> vector<214x32xf32>
    %11 = vector.broadcast %0 : vector<1x32xf32> to vector<214x32xf32>
    %12 = arith.addf %10, %11 : vector<214x32xf32>
    %13 = math.tanh %12 : vector<214x32xf32>
    %14 = arith.truncf %13 : vector<214x32xf32> to vector<214x32xbf16>
    %c0_11 = arith.constant 0 : index
    %c0_12 = arith.constant 0 : index
    %15 = vector.load %arg4[%c0_11, %c0_12] : memref<32x32xbf16, #tpu.memory_space<vmem>>, vector<32x32xbf16>
    %cst_13 = arith.constant dense<0.000000e+00> : vector<214x32xf32>
    %16 = tpu.matmul %14, %15, %cst_13 {dimension_numbers = #tpu.dot_dimension_numbers<[1], [0], [0], [1], [0, 0, 1, 1], [], []>} : vector<214x32xbf16>, vector<32x32xbf16>, vector<214x32xf32> -> vector<214x32xf32>
    %17 = vector.broadcast %1 : vector<1x32xf32> to vector<214x32xf32>
    %18 = arith.addf %16, %17 : vector<214x32xf32>
    %19 = math.tanh %18 : vector<214x32xf32>
    %20 = arith.truncf %19 : vector<214x32xf32> to vector<214x32xbf16>
    %c0_14 = arith.constant 0 : index
    %c0_15 = arith.constant 0 : index
    %21 = vector.load %arg5[%c0_14, %c0_15] : memref<32x32xbf16, #tpu.memory_space<vmem>>, vector<32x32xbf16>
    %cst_16 = arith.constant dense<0.000000e+00> : vector<214x32xf32>
    %22 = tpu.matmul %20, %21, %cst_16 {dimension_numbers = #tpu.dot_dimension_numbers<[1], [0], [0], [1], [0, 0, 1, 1], [], []>} : vector<214x32xbf16>, vector<32x32xbf16>, vector<214x32xf32> -> vector<214x32xf32>
    %23 = vector.broadcast %2 : vector<1x32xf32> to vector<214x32xf32>
    %24 = arith.addf %22, %23 : vector<214x32xf32>
    %25 = math.tanh %24 : vector<214x32xf32>
    %26 = arith.truncf %25 : vector<214x32xf32> to vector<214x32xbf16>
    %c0_17 = arith.constant 0 : index
    %c0_18 = arith.constant 0 : index
    %27 = vector.load %arg6[%c0_17, %c0_18] : memref<32x128xbf16, #tpu.memory_space<vmem>>, vector<32x128xbf16>
    %cst_19 = arith.constant dense<0.000000e+00> : vector<214x128xf32>
    %28 = tpu.matmul %26, %27, %cst_19 {dimension_numbers = #tpu.dot_dimension_numbers<[1], [0], [0], [1], [0, 0, 1, 1], [], []>} : vector<214x32xbf16>, vector<32x128xbf16>, vector<214x128xf32> -> vector<214x128xf32>
    %29 = vector.broadcast %3 : vector<1x128xf32> to vector<214x128xf32>
    %30 = arith.addf %28, %29 : vector<214x128xf32>
    %31 = tpu.iota {dimensions = array<i32: 1>} : vector<214x128xi32>
    %c4_i32 = arith.constant 4 : i32
    %32 = vector.broadcast %c4_i32 : i32 to vector<214x128xi32>
    %33 = arith.cmpi slt, %31, %32 : vector<214x128xi32>
    %cst_20 = arith.constant 0.000000e+00 : f32
    %34 = vector.broadcast %cst_20 : f32 to vector<214x128xf32>
    %35 = arith.select %33, %30, %34 : vector<214x128xi1>, vector<214x128xf32>
    %c2_i32 = arith.constant 2 : i32
    %36 = vector.broadcast %c2_i32 : i32 to vector<214x128xi32>
    %37 = arith.cmpi slt, %31, %36 : vector<214x128xi32>
    %c0_21 = arith.constant 0 : index
    %c0_22 = arith.constant 0 : index
    %38 = vector.load %arg2[%c0_21, %c0_22] : memref<214x128xf32, #tpu.memory_space<vmem>>, vector<214x128xf32>
    %cst_23 = arith.constant 5.000000e-01 : f32
    %39 = vector.broadcast %cst_23 : f32 to vector<214x128xf32>
    %40 = arith.mulf %39, %35 : vector<214x128xf32>
    %41 = math.exp %40 : vector<214x128xf32>
    %42 = arith.mulf %38, %41 : vector<214x128xf32>
    %43 = arith.select %37, %35, %42 : vector<214x128xi1>, vector<214x128xf32>
    %44 = arith.truncf %43 : vector<214x128xf32> to vector<214x128xbf16>
    %c0_24 = arith.constant 0 : index
    %c0_25 = arith.constant 0 : index
    %45 = vector.load %arg7[%c0_24, %c0_25] : memref<128x32xbf16, #tpu.memory_space<vmem>>, vector<128x32xbf16>
    %cst_26 = arith.constant dense<0.000000e+00> : vector<214x32xf32>
    %46 = tpu.matmul %44, %45, %cst_26 {dimension_numbers = #tpu.dot_dimension_numbers<[1], [0], [0], [1], [0, 0, 1, 1], [], []>} : vector<214x128xbf16>, vector<128x32xbf16>, vector<214x32xf32> -> vector<214x32xf32>
    %47 = vector.broadcast %4 : vector<1x32xf32> to vector<214x32xf32>
    %48 = arith.addf %46, %47 : vector<214x32xf32>
    %49 = math.tanh %48 : vector<214x32xf32>
    %50 = arith.truncf %49 : vector<214x32xf32> to vector<214x32xbf16>
    %c0_27 = arith.constant 0 : index
    %c0_28 = arith.constant 0 : index
    %51 = vector.load %arg8[%c0_27, %c0_28] : memref<32x32xbf16, #tpu.memory_space<vmem>>, vector<32x32xbf16>
    %cst_29 = arith.constant dense<0.000000e+00> : vector<214x32xf32>
    %52 = tpu.matmul %50, %51, %cst_29 {dimension_numbers = #tpu.dot_dimension_numbers<[1], [0], [0], [1], [0, 0, 1, 1], [], []>} : vector<214x32xbf16>, vector<32x32xbf16>, vector<214x32xf32> -> vector<214x32xf32>
    %53 = vector.broadcast %5 : vector<1x32xf32> to vector<214x32xf32>
    %54 = arith.addf %52, %53 : vector<214x32xf32>
    %55 = math.tanh %54 : vector<214x32xf32>
    %56 = arith.truncf %55 : vector<214x32xf32> to vector<214x32xbf16>
    %c0_30 = arith.constant 0 : index
    %c0_31 = arith.constant 0 : index
    %57 = vector.load %arg9[%c0_30, %c0_31] : memref<32x128xbf16, #tpu.memory_space<vmem>>, vector<32x128xbf16>
    %cst_32 = arith.constant dense<0.000000e+00> : vector<214x128xf32>
    %58 = tpu.matmul %56, %57, %cst_32 {dimension_numbers = #tpu.dot_dimension_numbers<[1], [0], [0], [1], [0, 0, 1, 1], [], []>} : vector<214x32xbf16>, vector<32x128xbf16>, vector<214x128xf32> -> vector<214x128xf32>
    %59 = vector.broadcast %6 : vector<1x128xf32> to vector<214x128xf32>
    %60 = arith.addf %58, %59 : vector<214x128xf32>
    %c124_i32 = arith.constant 124 : i32
    %61 = vector.broadcast %c124_i32 : i32 to vector<214x128xi32>
    %62 = arith.cmpi slt, %31, %61 : vector<214x128xi32>
    %63 = arith.select %62, %60, %30 : vector<214x128xi1>, vector<214x128xf32>
    %c0_33 = arith.constant 0 : index
    %c0_34 = arith.constant 0 : index
    %64 = vector.load %arg11[%c0_33, %c0_34] : memref<214x128xf32, #tpu.memory_space<vmem>>, vector<214x128xf32>
    tpu.vector_store %arg11[%c0_33, %c0_34], %63 {strides = array<i32>} : memref<214x128xf32, #tpu.memory_space<vmem>>, vector<214x128xf32>,
    return
  }
  func.func @transform_0(%arg0: i32) -> (i32, i32) {
    %c0_i32 = arith.constant 0 : i32
    %c0_i32_0 = arith.constant 0 : i32
    return %arg0, %c0_i32 : i32, i32
  }
  func.func @transform_1(%arg0: i32) -> (i32, i32) {
    %c0_i32 = arith.constant 0 : i32
    %c0_i32_0 = arith.constant 0 : i32
    return %arg0, %c0_i32 : i32, i32
  }
  func.func @transform_2(%arg0: i32) -> (i32, i32) {
    %c0_i32 = arith.constant 0 : i32
    %c0_i32_0 = arith.constant 0 : i32
    %c0_i32_1 = arith.constant 0 : i32
    return %c0_i32, %c0_i32_0 : i32, i32
  }
  func.func @transform_3(%arg0: i32) -> (i32, i32) {
    %c0_i32 = arith.constant 0 : i32
    %c0_i32_0 = arith.constant 0 : i32
    %c0_i32_1 = arith.constant 0 : i32
    return %c0_i32, %c0_i32_0 : i32, i32
  }
  func.func @transform_4(%arg0: i32) -> (i32, i32) {
    %c0_i32 = arith.constant 0 : i32
    %c0_i32_0 = arith.constant 0 : i32
    %c0_i32_1 = arith.constant 0 : i32
    return %c0_i32, %c0_i32_0 : i32, i32
  }
  func.func @transform_5(%arg0: i32) -> (i32, i32) {
    %c0_i32 = arith.constant 0 : i32
    %c0_i32_0 = arith.constant 0 : i32
    %c0_i32_1 = arith.constant 0 : i32
    return %c0_i32, %c0_i32_0 : i32, i32
  }
  func.func @transform_6(%arg0: i32) -> (i32, i32) {
    %c0_i32 = arith.constant 0 : i32
    %c0_i32_0 = arith.constant 0 : i32
    %c0_i32_1 = arith.constant 0 : i32
    return %c0_i32, %c0_i32_0 : i32, i32
  }
  func.func @transform_7(%arg0: i32) -> (i32, i32) {
    %c0_i32 = arith.constant 0 : i32
    %c0_i32_0 = arith.constant 0 : i32
    %c0_i32_1 = arith.constant 0 : i32
    return %c0_i32, %c0_i32_0 : i32, i32
  }
  func.func @transform_8(%arg0: i32) -> (i32, i32) {
    %c0_i32 = arith.constant 0 : i32
    %c0_i32_0 = arith.constant 0 : i32
    %c0_i32_1 = arith.constant 0 : i32
    return %c0_i32, %c0_i32_0 : i32, i32
  }
  func.func @transform_9(%arg0: i32) -> (i32, i32) {
    %c0_i32 = arith.constant 0 : i32
    %c0_i32_0 = arith.constant 0 : i32
    %c0_i32_1 = arith.constant 0 : i32
    return %c0_i32, %c0_i32_0 : i32, i32
  }
  func.func @transform_10(%arg0: i32) -> (i32, i32) {
    %c0_i32 = arith.constant 0 : i32
    %c0_i32_0 = arith.constant 0 : i32
    return %arg0, %c0_i32 : i32, i32
  }
}

</mosaic_0001>

<llo_original>
// kernel: vae_forward.1
$region0: #{vae_forward.1}
  #allocation0 [shape = 'u32[]', space=smem, size = 0x4, offset = 0x4, fixed_abs, tag = 'smem constant byte address 0x4 - core index']
  #allocation1 [shape = 'u32[144,128]{1,0:T(1,128)}', space=vmem, size = 0x12000, scoped, tag = 'internal scratch']
  %s0 = inlined_call_operand.vmem [shape: f32[214,16], index: 0, kind: input, shape index: {}]
  %s1 = inlined_call_operand.vmem [shape: f32[214,128], index: 1, kind: input, shape index: {}]
  %s2 = inlined_call_operand.vmem [shape: bf16[16,32], index: 2, kind: input, shape index: {}]
  %s3 = inlined_call_operand.vmem [shape: bf16[32,32], index: 3, kind: input, shape index: {}]
  %s4 = inlined_call_operand.vmem [shape: bf16[32,32], index: 4, kind: input, shape index: {}]
  %s5 = inlined_call_operand.vmem [shape: bf16[32,128], index: 5, kind: input, shape index: {}]
  %s6 = inlined_call_operand.vmem [shape: bf16[128,32], index: 6, kind: input, shape index: {}]
  %s7 = inlined_call_operand.vmem [shape: bf16[32,32], index: 7, kind: input, shape index: {}]
  %s8 = inlined_call_operand.vmem [shape: bf16[32,128], index: 8, kind: input, shape index: {}]
  %s9 = inlined_call_operand.vmem [shape: f32[8,128], index: 9, kind: input, shape index: {}]
  %s10 = inlined_call_operand.vmem [shape: f32[214,128], index: 10, kind: output, shape index: {}]
  %s11 = sld [smem:[#allocation0]]
  $region50: #{vae_forward.1} parent=0
    _
  %s13 = ssub.s32 1, %s11
  %s14 = scalar_select 0, %s13, %s11
  // Predicated region
  $region2: #{vae_forward.1} parent=0 // pred_check
    _
  $region3: #{vae_forward.1} parent=0 // pred_check_branch
    %16 = sbr.rel (0) target = $region5
  $region4: #{vae_forward.1} parent=0 // pred_region
    _
  $region5: #{vae_forward.1} parent=0 // pred_fallthru
    _
  // Predicated region
  $region6: #{vae_forward.1} parent=0 // pred_check
    _
  $region7: #{vae_forward.1} parent=0 // pred_check_branch
    %18 = sbr.rel (0) target = $region9
  $region8: #{vae_forward.1} parent=0 // pred_region
    _
  $region9: #{vae_forward.1} parent=0 // pred_fallthru
    _
  // Predicated region
  $region10: #{vae_forward.1} parent=0 // pred_check
    _
  $region11: #{vae_forward.1} parent=0 // pred_check_branch
    %20 = sbr.rel (0) target = $region13
  $region12: #{vae_forward.1} parent=0 // pred_region
    _
  $region13: #{vae_forward.1} parent=0 // pred_fallthru
    _
  // Predicated region
  $region14: #{vae_forward.1} parent=0 // pred_check
    _
  $region15: #{vae_forward.1} parent=0 // pred_check_branch
    %22 = sbr.rel (0) target = $region17
  $region16: #{vae_forward.1} parent=0 // pred_region
    _
  $region17: #{vae_forward.1} parent=0 // pred_fallthru
    _
  // Predicated region
  $region18: #{vae_forward.1} parent=0 // pred_check
    _
  $region19: #{vae_forward.1} parent=0 // pred_check_branch
    %24 = sbr.rel (0) target = $region21
  $region20: #{vae_forward.1} parent=0 // pred_region
    _
  $region21: #{vae_forward.1} parent=0 // pred_fallthru
    _
  // Predicated region
  $region22: #{vae_forward.1} parent=0 // pred_check
    _
  $region23: #{vae_forward.1} parent=0 // pred_check_branch
    %26 = sbr.rel (0) target = $region25
  $region24: #{vae_forward.1} parent=0 // pred_region
    _
  $region25: #{vae_forward.1} parent=0 // pred_fallthru
    _
  // Predicated region
  $region26: #{vae_forward.1} parent=0 // pred_check
    _
  $region27: #{vae_forward.1} parent=0 // pred_check_branch
    %28 = sbr.rel (0) target = $region29
  $region28: #{vae_forward.1} parent=0 // pred_region
    _
  $region29: #{vae_forward.1} parent=0 // pred_fallthru
    _
  // Predicated region
  $region30: #{vae_forward.1} parent=0 // pred_check
    _
  $region31: #{vae_forward.1} parent=0 // pred_check_branch
    %30 = sbr.rel (0) target = $region33
  $region32: #{vae_forward.1} parent=0 // pred_region
    _
  $region33: #{vae_forward.1} parent=0 // pred_fallthru
    _
  // Predicated region
  $region34: #{vae_forward.1} parent=0 // pred_check
    _
  $region35: #{vae_forward.1} parent=0 // pred_check_branch
    %32 = sbr.rel (0) target = $region37
  $region36: #{vae_forward.1} parent=0 // pred_region
    _
  $region37: #{vae_forward.1} parent=0 // pred_fallthru
    _
  // Predicated region
  $region38: #{vae_forward.1} parent=0 // pred_check
    _
  $region39: #{vae_forward.1} parent=0 // pred_check_branch
    %34 = sbr.rel (0) target = $region41
  $region40: #{vae_forward.1} parent=0 // pred_region
    _
  $region41: #{vae_forward.1} parent=0 // pred_fallthru
    _
  %v36 = vld [vmem:[%s9] sm:$0x1]
  %v37 = vld [vmem:[%s9 + $0x1] sm:$0x1]
  %v38 = vld [vmem:[%s9 + $0x2] sm:$0x1]
  %v39 = vld [vmem:[%s9 + $0x3] sm:$0x1]
  %v40 = vld [vmem:[%s9 + $0x4] sm:$0x1]
  %v41 = vld [vmem:[%s9 + $0x5] sm:$0x1]
  %v42 = vld [vmem:[%s9 + $0x6] sm:$0x1]
  %v43 = vld [vmem:[%s0] sm:$0xff]
  %v44 = vld [vmem:[%s0 + $0x8] sm:$0xff]
  %v45 = vld [vmem:[%s0 + $0x10] sm:$0xff]
  %v46 = vld [vmem:[%s0 + $0x18] sm:$0xff]
  %v47 = vld [vmem:[%s0 + $0x20] sm:$0xff]
  %v48 = vld [vmem:[%s0 + $0x28] sm:$0xff]
  %v49 = vld [vmem:[%s0 + $0x30] sm:$0xff]
  %v50 = vld [vmem:[%s0 + $0x38] sm:$0xff]
  %v51 = vld [vmem:[%s0 + $0x40] sm:$0xff]
  %v52 = vld [vmem:[%s0 + $0x48] sm:$0xff]
  %v53 = vld [vmem:[%s0 + $0x50] sm:$0xff]
  %v54 = vld [vmem:[%s0 + $0x58] sm:$0xff]
  %v55 = vld [vmem:[%s0 + $0x60] sm:$0xff]
  %v56 = vld [vmem:[%s0 + $0x68] sm:$0xff]
  %v57 = vld [vmem:[%s0 + $0x70] sm:$0xff]
  %v58 = vld [vmem:[%s0 + $0x78] sm:$0xff]
  %v59 = vld [vmem:[%s0 + $0x80] sm:$0xff]
  %v60 = vld [vmem:[%s0 + $0x88] sm:$0xff]
  %v61 = vld [vmem:[%s0 + $0x90] sm:$0xff]
  %v62 = vld [vmem:[%s0 + $0x98] sm:$0xff]
  %v63 = vld [vmem:[%s0 + $0xa0] sm:$0xff]
  %v64 = vld [vmem:[%s0 + $0xa8] sm:$0xff]
  %v65 = vld [vmem:[%s0 + $0xb0] sm:$0xff]
  %v66 = vld [vmem:[%s0 + $0xb8] sm:$0xff]
  %v67 = vld [vmem:[%s0 + $0xc0] sm:$0xff]
  %v68 = vld [vmem:[%s0 + $0xc8] sm:$0xff]
  %v69 = vld [vmem:[%s0 + $0xd0] sm:$0x3f]
  %v70 = vpack.c.bf16 %v44, %v43
  %v71 = vpack.c.bf16 %v46, %v45
  %v72 = vpack.c.bf16 %v48, %v47
  %v73 = vpack.c.bf16 %v50, %v49
  %v74 = vpack.c.bf16 %v52, %v51
  %v75 = vpack.c.bf16 %v54, %v53
  %v76 = vpack.c.bf16 %v56, %v55
  %v77 = vpack.c.bf16 %v58, %v57
  %v78 = vpack.c.bf16 %v60, %v59
  %v79 = vpack.c.bf16 %v62, %v61
  %v80 = vpack.c.bf16 %v64, %v63
  %v81 = vpack.c.bf16 %v66, %v65
  %v82 = vpack.c.bf16 %v68, %v67
  %v83 = vpack.c.bf16 %v69, %v69
  %v84 = vld [vmem:[%s2] sm:$0xf]
  %v85 = vld [vmem:[%s2 + $0x4] sm:$0xf]
  %v86 = vlaneseq
  %v87 = vshrl.u32 %v86, 7
  %v88 = vsub.s32 0, %v87
  %v89 = vrot.slane %v36, %v88
  %v92 = vunpack.c.l.b16 %v84
  %v93 = vunpack.c.l.b16 %v85
  %v94 = vpack.c.b16 %v93, %v92
  %vm96 = vcmask 130048
  %v98 = vsel %vm96, %v70, 0
  %v101 = vsel %vm96, %v71, 0
  %v104 = vsel %vm96, %v72, 0
  %v107 = vsel %vm96, %v73, 0
  %v110 = vsel %vm96, %v74, 0
  %v113 = vsel %vm96, %v75, 0
  %v116 = vsel %vm96, %v76, 0
  %v119 = vsel %vm96, %v77, 0
  %v122 = vsel %vm96, %v78, 0
  %v125 = vsel %vm96, %v79, 0
  %v128 = vsel %vm96, %v80, 0
  %v131 = vsel %vm96, %v81, 0
  %v134 = vsel %vm96, %v82, 0
  %v137 = vsel %vm96, %v83, 0
  %139 = vmatprep.subr.bf16.mxu0 0
  %140 = vmatpush1.bf16.msra.mxu0 %v94
  %141 = vmatprep.subr.bf16.mxu0 0
  %142 = vmatpush1.bf16.msra.mxu0 0
  %143 = vmatprep.subr.bf16.mxu0 0
  %144 = vmatpush1.bf16.msra.mxu0 0
  %145 = vmatprep.subr.bf16.mxu0 0
  %146 = vmatpush1.bf16.msra.mxu0 0
  %147 = vmatprep.subr.bf16.mxu0 0
  %148 = vmatpush1.bf16.msra.mxu0 0
  %149 = vmatprep.subr.bf16.mxu0 0
  %150 = vmatpush1.bf16.msra.mxu0 0
  %151 = vmatprep.subr.bf16.mxu0 0
  %152 = vmatpush1.bf16.msra.mxu0 0
  %153 = vmatprep.subr.bf16.mxu0 0
  %154 = vmatpush1.bf16.msra.mxu0 0
  %155 = vmatprep.subr.bf16.mxu0 0
  %156 = vmatpush1.bf16.msra.mxu0 0
  %157 = vmatprep.subr.bf16.mxu0 0
  %158 = vmatpush1.bf16.msra.mxu0 0
  %159 = vmatprep.subr.bf16.mxu0 0
  %160 = vmatpush1.bf16.msra.mxu0 0
  %161 = vmatprep.subr.bf16.mxu0 0
  %162 = vmatpush1.bf16.msra.mxu0 0
  %163 = vmatprep.subr.bf16.mxu0 0
  %164 = vmatpush1.bf16.msra.mxu0 0
  %165 = vmatprep.subr.bf16.mxu0 0
  %166 = vmatpush1.bf16.msra.mxu0 0
  %167 = vmatprep.subr.bf16.mxu0 0
  %168 = vmatpush1.bf16.msra.mxu0 0
  %169 = vmatprep.subr.bf16.mxu0 0
  %170 = vmatpush1.bf16.msra.mxu0 0
  %171 = vmatprep.mubr.bf16.mxu0 0
  %172 = vmatmul.mubr.bf16.gmra.mrb[0].mxu0 %v98
  %v173 = vpop.f32.mrb[0].mxu0
  %v174 = vadd.f32 %v89, %v173
  %v175 = vpop.f32.mrb[0].mxu0
  %v176 = vpop.f32.mrb[0].mxu0
  %v177 = vadd.f32 %v89, %v176
  %v178 = vpop.f32.mrb[0].mxu0
  %179 = vmatprep.mubr.bf16.mxu0 0
  %180 = vmatmul.mubr.bf16.gmra.mrb[0].mxu0 %v101
  %v181 = vpop.f32.mrb[0].mxu0
  %v182 = vadd.f32 %v89, %v181
  %v183 = vpop.f32.mrb[0].mxu0
  %v184 = vpop.f32.mrb[0].mxu0
  %v185 = vadd.f32 %v89, %v184
  %v186 = vpop.f32.mrb[0].mxu0
  %187 = vmatprep.mubr.bf16.mxu0 0
  %188 = vmatmul.mubr.bf16.gmra.mrb[0].mxu0 %v104
  %v189 = vpop.f32.mrb[0].mxu0
  %v190 = vadd.f32 %v89, %v189
  %v191 = vpop.f32.mrb[0].mxu0
  %v192 = vpop.f32.mrb[0].mxu0
  %v193 = vadd.f32 %v89, %v192
  %v194 = vpop.f32.mrb[0].mxu0
  %195 = vmatprep.mubr.bf16.mxu0 0
  %196 = vmatmul.mubr.bf16.gmra.mrb[0].mxu0 %v107
  %v197 = vpop.f32.mrb[0].mxu0
  %v198 = vadd.f32 %v89, %v197
  %v199 = vpop.f32.mrb[0].mxu0
  %v200 = vpop.f32.mrb[0].mxu0
  %v201 = vadd.f32 %v89, %v200
  %v202 = vpop.f32.mrb[0].mxu0
  %203 = vmatprep.mubr.bf16.mxu0 0
  %204 = vmatmul.mubr.bf16.gmra.mrb[0].mxu0 %v110
  %v205 = vpop.f32.mrb[0].mxu0
  %v206 = vadd.f32 %v89, %v205
  %v207 = vpop.f32.mrb[0].mxu0
  %v208 = vpop.f32.mrb[0].mxu0
  %v209 = vadd.f32 %v89, %v208
  %v210 = vpop.f32.mrb[0].mxu0
  %211 = vmatprep.mubr.bf16.mxu0 0
  %212 = vmatmul.mubr.bf16.gmra.mrb[0].mxu0 %v113
  %v213 = vpop.f32.mrb[0].mxu0
  %v214 = vadd.f32 %v89, %v213
  %v215 = vpop.f32.mrb[0].mxu0
  %v216 = vpop.f32.mrb[0].mxu0
  %v217 = vadd.f32 %v89, %v216
  %v218 = vpop.f32.mrb[0].mxu0
  %219 = vmatprep.mubr.bf16.mxu0 0
  %220 = vmatmul.mubr.bf16.gmra.mrb[0].mxu0 %v116
  %v221 = vpop.f32.mrb[0].mxu0
  %v222 = vadd.f32 %v89, %v221
  %v223 = vpop.f32.mrb[0].mxu0
  %v224 = vpop.f32.mrb[0].mxu0
  %v225 = vadd.f32 %v89, %v224
  %v226 = vpop.f32.mrb[0].mxu0
  %227 = vmatprep.mubr.bf16.mxu0 0
  %228 = vmatmul.mubr.bf16.gmra.mrb[0].mxu0 %v119
  %v229 = vpop.f32.mrb[0].mxu0
  %v230 = vadd.f32 %v89, %v229
  %v231 = vpop.f32.mrb[0].mxu0
  %v232 = vpop.f32.mrb[0].mxu0
  %v233 = vadd.f32 %v89, %v232
  %v234 = vpop.f32.mrb[0].mxu0
  %235 = vmatprep.mubr.bf16.mxu0 0
  %236 = vmatmul.mubr.bf16.gmra.mrb[0].mxu0 %v122
  %v237 = vpop.f32.mrb[0].mxu0
  %v238 = vadd.f32 %v89, %v237
  %v239 = vpop.f32.mrb[0].mxu0
  %v240 = vpop.f32.mrb[0].mxu0
  %v241 = vadd.f32 %v89, %v240
  %v242 = vpop.f32.mrb[0].mxu0
  %243 = vmatprep.mubr.bf16.mxu0 0
  %244 = vmatmul.mubr.bf16.gmra.mrb[0].mxu0 %v125
  %v245 = vpop.f32.mrb[0].mxu0
  %v246 = vadd.f32 %v89, %v245
  %v247 = vpop.f32.mrb[0].mxu0
  %v248 = vpop.f32.mrb[0].mxu0
  %v249 = vadd.f32 %v89, %v248
  %v250 = vpop.f32.mrb[0].mxu0
  %251 = vmatprep.mubr.bf16.mxu0 0
  %252 = vmatmul.mubr.bf16.gmra.mrb[0].mxu0 %v128
  %v253 = vpop.f32.mrb[0].mxu0
  %v254 = vadd.f32 %v89, %v253
  %v255 = vpop.f32.mrb[0].mxu0
  %v256 = vpop.f32.mrb[0].mxu0
  %v257 = vadd.f32 %v89, %v256
  %v258 = vpop.f32.mrb[0].mxu0
  %259 = vmatprep.mubr.bf16.mxu0 0
  %260 = vmatmul.mubr.bf16.gmra.mrb[0].mxu0 %v131
  %v261 = vpop.f32.mrb[0].mxu0
  %v262 = vadd.f32 %v89, %v261
  %v263 = vpop.f32.mrb[0].mxu0
  %v264 = vpop.f32.mrb[0].mxu0
  %v265 = vadd.f32 %v89, %v264
  %v266 = vpop.f32.mrb[0].mxu0
  %267 = vmatprep.mubr.bf16.mxu0 0
  %268 = vmatmul.mubr.bf16.gmra.mrb[0].mxu0 %v134
  %v269 = vpop.f32.mrb[0].mxu0
  %v270 = vadd.f32 %v89, %v269
  %v271 = vpop.f32.mrb[0].mxu0
  %v272 = vpop.f32.mrb[0].mxu0
  %v273 = vadd.f32 %v89, %v272
  %v274 = vpop.f32.mrb[0].mxu0
  %275 = vmatprep.mubr.bf16.mxu0 0
  %276 = vmatmul.mubr.bf16.gmra.mrb[0].mxu0 %v137
  %v277 = vpop.f32.mrb[0].mxu0
  %v278 = vadd.f32 %v89, %v277
  %v279 = vpop.f32.mrb[0].mxu0
  %v280 = vpop.f32.mrb[0].mxu0
  %v281 = vpop.f32.mrb[0].mxu0
  %282 = vdwg.mxu0
  %v283 = vtanh.pop %v174
  %v284 = vtanh.pop %v177
  %v285 = vtanh.pop %v182
  %v286 = vtanh.pop %v185
  %v287 = vtanh.pop %v190
  %v288 = vtanh.pop %v193
  %v289 = vtanh.pop %v198
  %v290 = vtanh.pop %v201
  %v291 = vtanh.pop %v206
  %v292 = vtanh.pop %v209
  %v293 = vtanh.pop %v214
  %v294 = vtanh.pop %v217
  %v295 = vtanh.pop %v222
  %v296 = vtanh.pop %v225
  %v297 = vtanh.pop %v230
  %v298 = vtanh.pop %v233
  %v299 = vtanh.pop %v238
  %v300 = vtanh.pop %v241
  %v301 = vtanh.pop %v246
  %v302 = vtanh.pop %v249
  %v303 = vtanh.pop %v254
  %v304 = vtanh.pop %v257
  %v305 = vtanh.pop %v262
  %v306 = vtanh.pop %v265
  %v307 = vtanh.pop %v270
  %v308 = vtanh.pop %v273
  %v309 = vtanh.pop %v278
  %v310 = vpack.c.bf16 %v284, %v283
  %v311 = vpack.c.bf16 %v286, %v285
  %v312 = vpack.c.bf16 %v288, %v287
  %v313 = vpack.c.bf16 %v290, %v289
  %v314 = vpack.c.bf16 %v292, %v291
  %v315 = vpack.c.bf16 %v294, %v293
  %v316 = vpack.c.bf16 %v296, %v295
  %v317 = vpack.c.bf16 %v298, %v297
  %v318 = vpack.c.bf16 %v300, %v299
  %v319 = vpack.c.bf16 %v302, %v301
  %v320 = vpack.c.bf16 %v304, %v303
  %v321 = vpack.c.bf16 %v306, %v305
  %v322 = vpack.c.bf16 %v308, %v307
  %v323 = vpack.c.bf16 %v309, %v309
  %v324 = vld [vmem:[%s3] sm:$0xf]
  %v325 = vld [vmem:[%s3 + $0x4] sm:$0xf]
  %v326 = vld [vmem:[%s3 + $0x8] sm:$0xf]
  %v327 = vld [vmem:[%s3 + $0xc] sm:$0xf]
  %v328 = vlaneseq
  %v329 = vshrl.u32 %v328, 7
  %v330 = vsub.s32 0, %v329
  %v331 = vrot.slane %v37, %v330
  %v336 = vunpack.c.l.b16 %v324
  %v337 = vunpack.c.l.b16 %v325
  %v338 = vunpack.c.l.b16 %v326
  %v339 = vunpack.c.l.b16 %v327
  %v340 = vpack.c.b16 %v337, %v336
  %v341 = vpack.c.b16 %v339, %v338
  %vm344 = vcmask 261120
  %v346 = vsel %vm344, %v310, 0
  %v349 = vsel %vm344, %v311, 0
  %v352 = vsel %vm344, %v312, 0
  %v355 = vsel %vm344, %v313, 0
  %v358 = vsel %vm344, %v314, 0
  %v361 = vsel %vm344, %v315, 0
  %v364 = vsel %vm344, %v316, 0
  %v367 = vsel %vm344, %v317, 0
  %v370 = vsel %vm344, %v318, 0
  %v373 = vsel %vm344, %v319, 0
  %v376 = vsel %vm344, %v320, 0
  %v379 = vsel %vm344, %v321, 0
  %v382 = vsel %vm344, %v322, 0
  %v385 = vsel %vm344, %v323, 0
  %387 = vmatprep.subr.bf16.mxu0 0
  %388 = vmatpush1.bf16.msra.mxu0 %v340
  %389 = vmatprep.subr.bf16.mxu0 0
  %390 = vmatpush1.bf16.msra.mxu0 %v341
  %391 = vmatprep.subr.bf16.mxu0 0
  %392 = vmatpush1.bf16.msra.mxu0 0
  %393 = vmatprep.subr.bf16.mxu0 0
  %394 = vmatpush1.bf16.msra.mxu0 0
  %395 = vmatprep.subr.bf16.mxu0 0
  %396 = vmatpush1.bf16.msra.mxu0 0
  %397 = vmatprep.subr.bf16.mxu0 0
  %398 = vmatpush1.bf16.msra.mxu0 0
  %399 = vmatprep.subr.bf16.mxu0 0
  %400 = vmatpush1.bf16.msra.mxu0 0
  %401 = vmatprep.subr.bf16.mxu0 0
  %402 = vmatpush1.bf16.msra.mxu0 0
  %403 = vmatprep.subr.bf16.mxu0 0
  %404 = vmatpush1.bf16.msra.mxu0 0
  %405 = vmatprep.subr.bf16.mxu0 0
  %406 = vmatpush1.bf16.msra.mxu0 0
  %407 = vmatprep.subr.bf16.mxu0 0
  %408 = vmatpush1.bf16.msra.mxu0 0
  %409 = vmatprep.subr.bf16.mxu0 0
  %410 = vmatpush1.bf16.msra.mxu0 0
  %411 = vmatprep.subr.bf16.mxu0 0
  %412 = vmatpush1.bf16.msra.mxu0 0
  %413 = vmatprep.subr.bf16.mxu0 0
  %414 = vmatpush1.bf16.msra.mxu0 0
  %415 = vmatprep.subr.bf16.mxu0 0
  %416 = vmatpush1.bf16.msra.mxu0 0
  %417 = vmatprep.subr.bf16.mxu0 0
  %418 = vmatpush1.bf16.msra.mxu0 0
  %419 = vmatprep.mubr.bf16.mxu0 0
  %420 = vmatmul.mubr.bf16.gmra.mrb[0].mxu0 %v346
  %v421 = vpop.f32.mrb[0].mxu0
  %v422 = vadd.f32 %v331, %v421
  %v423 = vpop.f32.mrb[0].mxu0
  %v424 = vpop.f32.mrb[0].mxu0
  %v425 = vadd.f32 %v331, %v424
  %v426 = vpop.f32.mrb[0].mxu0
  %427 = vmatprep.mubr.bf16.mxu0 0
  %428 = vmatmul.mubr.bf16.gmra.mrb[0].mxu0 %v349
  %v429 = vpop.f32.mrb[0].mxu0
  %v430 = vadd.f32 %v331, %v429
  %v431 = vpop.f32.mrb[0].mxu0
  %v432 = vpop.f32.mrb[0].mxu0
  %v433 = vadd.f32 %v331, %v432
  %v434 = vpop.f32.mrb[0].mxu0
  %435 = vmatprep.mubr.bf16.mxu0 0
  %436 = vmatmul.mubr.bf16.gmra.mrb[0].mxu0 %v352
  %v437 = vpop.f32.mrb[0].mxu0
  %v438 = vadd.f32 %v331, %v437
  %v439 = vpop.f32.mrb[0].mxu0
  %v440 = vpop.f32.mrb[0].mxu0
  %v441 = vadd.f32 %v331, %v440
  %v442 = vpop.f32.mrb[0].mxu0
  %443 = vmatprep.mubr.bf16.mxu0 0
  %444 = vmatmul.mubr.bf16.gmra.mrb[0].mxu0 %v355
  %v445 = vpop.f32.mrb[0].mxu0
  %v446 = vadd.f32 %v331, %v445
  %v447 = vpop.f32.mrb[0].mxu0
  %v448 = vpop.f32.mrb[0].mxu0
  %v449 = vadd.f32 %v331, %v448
  %v450 = vpop.f32.mrb[0].mxu0
  %451 = vmatprep.mubr.bf16.mxu0 0
  %452 = vmatmul.mubr.bf16.gmra.mrb[0].mxu0 %v358
  %v453 = vpop.f32.mrb[0].mxu0
  %v454 = vadd.f32 %v331, %v453
  %v455 = vpop.f32.mrb[0].mxu0
  %v456 = vpop.f32.mrb[0].mxu0
  %v457 = vadd.f32 %v331, %v456
  %v458 = vpop.f32.mrb[0].mxu0
  %459 = vmatprep.mubr.bf16.mxu0 0
  %460 = vmatmul.mubr.bf16.gmra.mrb[0].mxu0 %v361
  %v461 = vpop.f32.mrb[0].mxu0
  %v462 = vadd.f32 %v331, %v461
  %v463 = vpop.f32.mrb[0].mxu0
  %v464 = vpop.f32.mrb[0].mxu0
  %v465 = vadd.f32 %v331, %v464
  %v466 = vpop.f32.mrb[0].mxu0
  %467 = vmatprep.mubr.bf16.mxu0 0
  %468 = vmatmul.mubr.bf16.gmra.mrb[0].mxu0 %v364
  %v469 = vpop.f32.mrb[0].mxu0
  %v470 = vadd.f32 %v331, %v469
  %v471 = vpop.f32.mrb[0].mxu0
  %v472 = vpop.f32.mrb[0].mxu0
  %v473 = vadd.f32 %v331, %v472
  %v474 = vpop.f32.mrb[0].mxu0
  %475 = vmatprep.mubr.bf16.mxu0 0
  %476 = vmatmul.mubr.bf16.gmra.mrb[0].mxu0 %v367
  %v477 = vpop.f32.mrb[0].mxu0
  %v478 = vadd.f32 %v331, %v477
  %v479 = vpop.f32.mrb[0].mxu0
  %v480 = vpop.f32.mrb[0].mxu0
  %v481 = vadd.f32 %v331, %v480
  %v482 = vpop.f32.mrb[0].mxu0
  %483 = vmatprep.mubr.bf16.mxu0 0
  %484 = vmatmul.mubr.bf16.gmra.mrb[0].mxu0 %v370
  %v485 = vpop.f32.mrb[0].mxu0
  %v486 = vadd.f32 %v331, %v485
  %v487 = vpop.f32.mrb[0].mxu0
  %v488 = vpop.f32.mrb[0].mxu0
  %v489 = vadd.f32 %v331, %v488
  %v490 = vpop.f32.mrb[0].mxu0
  %491 = vmatprep.mubr.bf16.mxu0 0
  %492 = vmatmul.mubr.bf16.gmra.mrb[0].mxu0 %v373
  %v493 = vpop.f32.mrb[0].mxu0
  %v494 = vadd.f32 %v331, %v493
  %v495 = vpop.f32.mrb[0].mxu0
  %v496 = vpop.f32.mrb[0].mxu0
  %v497 = vadd.f32 %v331, %v496
  %v498 = vpop.f32.mrb[0].mxu0
  %499 = vmatprep.mubr.bf16.mxu0 0
  %500 = vmatmul.mubr.bf16.gmra.mrb[0].mxu0 %v376
  %v501 = vpop.f32.mrb[0].mxu0
  %v502 = vadd.f32 %v331, %v501
  %v503 = vpop.f32.mrb[0].mxu0
  %v504 = vpop.f32.mrb[0].mxu0
  %v505 = vadd.f32 %v331, %v504
  %v506 = vpop.f32.mrb[0].mxu0
  %507 = vmatprep.mubr.bf16.mxu0 0
  %508 = vmatmul.mubr.bf16.gmra.mrb[0].mxu0 %v379
  %v509 = vpop.f32.mrb[0].mxu0
  %v510 = vadd.f32 %v331, %v509
  %v511 = vpop.f32.mrb[0].mxu0
  %v512 = vpop.f32.mrb[0].mxu0
  %v513 = vadd.f32 %v331, %v512
  %v514 = vpop.f32.mrb[0].mxu0
  %515 = vmatprep.mubr.bf16.mxu0 0
  %516 = vmatmul.mubr.bf16.gmra.mrb[0].mxu0 %v382
  %v517 = vpop.f32.mrb[0].mxu0
  %v518 = vadd.f32 %v331, %v517
  %v519 = vpop.f32.mrb[0].mxu0
  %v520 = vpop.f32.mrb[0].mxu0
  %v521 = vadd.f32 %v331, %v520
  %v522 = vpop.f32.mrb[0].mxu0
  %523 = vmatprep.mubr.bf16.mxu0 0
  %524 = vmatmul.mubr.bf16.gmra.mrb[0].mxu0 %v385
  %v525 = vpop.f32.mrb[0].mxu0
  %v526 = vadd.f32 %v331, %v525
  %v527 = vpop.f32.mrb[0].mxu0
  %v528 = vpop.f32.mrb[0].mxu0
  %v529 = vpop.f32.mrb[0].mxu0
  %530 = vdwg.mxu0
  %v531 = vtanh.pop %v422
  %v532 = vtanh.pop %v425
  %v533 = vtanh.pop %v430
  %v534 = vtanh.pop %v433
  %v535 = vtanh.pop %v438
  %v536 = vtanh.pop %v441
  %v537 = vtanh.pop %v446
  %v538 = vtanh.pop %v449
  %v539 = vtanh.pop %v454
  %v540 = vtanh.pop %v457
  %v541 = vtanh.pop %v462
  %v542 = vtanh.pop %v465
  %v543 = vtanh.pop %v470
  %v544 = vtanh.pop %v473
  %v545 = vtanh.pop %v478
  %v546 = vtanh.pop %v481
  %v547 = vtanh.pop %v486
  %v548 = vtanh.pop %v489
  %v549 = vtanh.pop %v494
  %v550 = vtanh.pop %v497
  %v551 = vtanh.pop %v502
  %v552 = vtanh.pop %v505
  %v553 = vtanh.pop %v510
  %v554 = vtanh.pop %v513
  %v555 = vtanh.pop %v518
  %v556 = vtanh.pop %v521
  %v557 = vtanh.pop %v526
  %v558 = vpack.c.bf16 %v532, %v531
  %v559 = vpack.c.bf16 %v534, %v533
  %v560 = vpack.c.bf16 %v536, %v535
  %v561 = vpack.c.bf16 %v538, %v537
  %v562 = vpack.c.bf16 %v540, %v539
  %v563 = vpack.c.bf16 %v542, %v541
  %v564 = vpack.c.bf16 %v544, %v543
  %v565 = vpack.c.bf16 %v546, %v545
  %v566 = vpack.c.bf16 %v548, %v547
  %v567 = vpack.c.bf16 %v550, %v549
  %v568 = vpack.c.bf16 %v552, %v551
  %v569 = vpack.c.bf16 %v554, %v553
  %v570 = vpack.c.bf16 %v556, %v555
  %v571 = vpack.c.bf16 %v557, %v557
  %v572 = vld [vmem:[%s4] sm:$0xf]
  %v573 = vld [vmem:[%s4 + $0x4] sm:$0xf]
  %v574 = vld [vmem:[%s4 + $0x8] sm:$0xf]
  %v575 = vld [vmem:[%s4 + $0xc] sm:$0xf]
  %v576 = vlaneseq
  %v577 = vshrl.u32 %v576, 7
  %v578 = vsub.s32 0, %v577
  %v579 = vrot.slane %v38, %v578
  %v584 = vunpack.c.l.b16 %v572
  %v585 = vunpack.c.l.b16 %v573
  %v586 = vunpack.c.l.b16 %v574
  %v587 = vunpack.c.l.b16 %v575
  %v588 = vpack.c.b16 %v585, %v584
  %v589 = vpack.c.b16 %v587, %v586
  %v593 = vsel %vm344, %v558, 0
  %v596 = vsel %vm344, %v559, 0
  %v599 = vsel %vm344, %v560, 0
  %v602 = vsel %vm344, %v561, 0
  %v605 = vsel %vm344, %v562, 0
  %v608 = vsel %vm344, %v563, 0
  %v611 = vsel %vm344, %v564, 0
  %v614 = vsel %vm344, %v565, 0
  %v617 = vsel %vm344, %v566, 0
  %v620 = vsel %vm344, %v567, 0
  %v623 = vsel %vm344, %v568, 0
  %v626 = vsel %vm344, %v569, 0
  %v629 = vsel %vm344, %v570, 0
  %v632 = vsel %vm344, %v571, 0
  %634 = vmatprep.subr.bf16.mxu0 0
  %635 = vmatpush1.bf16.msra.mxu0 %v588
  %636 = vmatprep.subr.bf16.mxu0 0
  %637 = vmatpush1.bf16.msra.mxu0 %v589
  %638 = vmatprep.subr.bf16.mxu0 0
  %639 = vmatpush1.bf16.msra.mxu0 0
  %640 = vmatprep.subr.bf16.mxu0 0
  %641 = vmatpush1.bf16.msra.mxu0 0
  %642 = vmatprep.subr.bf16.mxu0 0
  %643 = vmatpush1.bf16.msra.mxu0 0
  %644 = vmatprep.subr.bf16.mxu0 0
  %645 = vmatpush1.bf16.msra.mxu0 0
  %646 = vmatprep.subr.bf16.mxu0 0
  %647 = vmatpush1.bf16.msra.mxu0 0
  %648 = vmatprep.subr.bf16.mxu0 0
  %649 = vmatpush1.bf16.msra.mxu0 0
  %650 = vmatprep.subr.bf16.mxu0 0
  %651 = vmatpush1.bf16.msra.mxu0 0
  %652 = vmatprep.subr.bf16.mxu0 0
  %653 = vmatpush1.bf16.msra.mxu0 0
  %654 = vmatprep.subr.bf16.mxu0 0
  %655 = vmatpush1.bf16.msra.mxu0 0
  %656 = vmatprep.subr.bf16.mxu0 0
  %657 = vmatpush1.bf16.msra.mxu0 0
  %658 = vmatprep.subr.bf16.mxu0 0
  %659 = vmatpush1.bf16.msra.mxu0 0
  %660 = vmatprep.subr.bf16.mxu0 0
  %661 = vmatpush1.bf16.msra.mxu0 0
  %662 = vmatprep.subr.bf16.mxu0 0
  %663 = vmatpush1.bf16.msra.mxu0 0
  %664 = vmatprep.subr.bf16.mxu0 0
  %665 = vmatpush1.bf16.msra.mxu0 0
  %666 = vmatprep.mubr.bf16.mxu0 0
  %667 = vmatmul.mubr.bf16.gmra.mrb[0].mxu0 %v593
  %v668 = vpop.f32.mrb[0].mxu0
  %v669 = vadd.f32 %v579, %v668
  %v670 = vpop.f32.mrb[0].mxu0
  %v671 = vpop.f32.mrb[0].mxu0
  %v672 = vadd.f32 %v579, %v671
  %v673 = vpop.f32.mrb[0].mxu0
  %674 = vmatprep.mubr.bf16.mxu0 0
  %675 = vmatmul.mubr.bf16.gmra.mrb[0].mxu0 %v596
  %v676 = vpop.f32.mrb[0].mxu0
  %v677 = vadd.f32 %v579, %v676
  %v678 = vpop.f32.mrb[0].mxu0
  %v679 = vpop.f32.mrb[0].mxu0
  %v680 = vadd.f32 %v579, %v679
  %v681 = vpop.f32.mrb[0].mxu0
  %682 = vmatprep.mubr.bf16.mxu0 0
  %683 = vmatmul.mubr.bf16.gmra.mrb[0].mxu0 %v599
  %v684 = vpop.f32.mrb[0].mxu0
  %v685 = vadd.f32 %v579, %v684
  %v686 = vpop.f32.mrb[0].mxu0
  %v687 = vpop.f32.mrb[0].mxu0
  %v688 = vadd.f32 %v579, %v687
  %v689 = vpop.f32.mrb[0].mxu0
  %690 = vmatprep.mubr.bf16.mxu0 0
  %691 = vmatmul.mubr.bf16.gmra.mrb[0].mxu0 %v602
  %v692 = vpop.f32.mrb[0].mxu0
  %v693 = vadd.f32 %v579, %v692
  %v694 = vpop.f32.mrb[0].mxu0
  %v695 = vpop.f32.mrb[0].mxu0
  %v696 = vadd.f32 %v579, %v695
  %v697 = vpop.f32.mrb[0].mxu0
  %698 = vmatprep.mubr.bf16.mxu0 0
  %699 = vmatmul.mubr.bf16.gmra.mrb[0].mxu0 %v605
  %v700 = vpop.f32.mrb[0].mxu0
  %v701 = vadd.f32 %v579, %v700
  %v702 = vpop.f32.mrb[0].mxu0
  %v703 = vpop.f32.mrb[0].mxu0
  %v704 = vadd.f32 %v579, %v703
  %v705 = vpop.f32.mrb[0].mxu0
  %706 = vmatprep.mubr.bf16.mxu0 0
  %707 = vmatmul.mubr.bf16.gmra.mrb[0].mxu0 %v608
  %v708 = vpop.f32.mrb[0].mxu0
  %v709 = vadd.f32 %v579, %v708
  %v710 = vpop.f32.mrb[0].mxu0
  %v711 = vpop.f32.mrb[0].mxu0
  %v712 = vadd.f32 %v579, %v711
  %v713 = vpop.f32.mrb[0].mxu0
  %714 = vmatprep.mubr.bf16.mxu0 0
  %715 = vmatmul.mubr.bf16.gmra.mrb[0].mxu0 %v611
  %v716 = vpop.f32.mrb[0].mxu0
  %v717 = vadd.f32 %v579, %v716
  %v718 = vpop.f32.mrb[0].mxu0
  %v719 = vpop.f32.mrb[0].mxu0
  %v720 = vadd.f32 %v579, %v719
  %v721 = vpop.f32.mrb[0].mxu0
  %722 = vmatprep.mubr.bf16.mxu0 0
  %723 = vmatmul.mubr.bf16.gmra.mrb[0].mxu0 %v614
  %v724 = vpop.f32.mrb[0].mxu0
  %v725 = vadd.f32 %v579, %v724
  %v726 = vpop.f32.mrb[0].mxu0
  %v727 = vpop.f32.mrb[0].mxu0
  %v728 = vadd.f32 %v579, %v727
  %v729 = vpop.f32.mrb[0].mxu0
  %730 = vmatprep.mubr.bf16.mxu0 0
  %731 = vmatmul.mubr.bf16.gmra.mrb[0].mxu0 %v617
  %v732 = vpop.f32.mrb[0].mxu0
  %v733 = vadd.f32 %v579, %v732
  %v734 = vpop.f32.mrb[0].mxu0
  %v735 = vpop.f32.mrb[0].mxu0
  %v736 = vadd.f32 %v579, %v735
  %v737 = vpop.f32.mrb[0].mxu0
  %738 = vmatprep.mubr.bf16.mxu0 0
  %739 = vmatmul.mubr.bf16.gmra.mrb[0].mxu0 %v620
  %v740 = vpop.f32.mrb[0].mxu0
  %v741 = vadd.f32 %v579, %v740
  %v742 = vpop.f32.mrb[0].mxu0
  %v743 = vpop.f32.mrb[0].mxu0
  %v744 = vadd.f32 %v579, %v743
  %v745 = vpop.f32.mrb[0].mxu0
  %746 = vmatprep.mubr.bf16.mxu0 0
  %747 = vmatmul.mubr.bf16.gmra.mrb[0].mxu0 %v623
  %v748 = vpop.f32.mrb[0].mxu0
  %v749 = vadd.f32 %v579, %v748
  %v750 = vpop.f32.mrb[0].mxu0
  %v751 = vpop.f32.mrb[0].mxu0
  %v752 = vadd.f32 %v579, %v751
  %v753 = vpop.f32.mrb[0].mxu0
  %754 = vmatprep.mubr.bf16.mxu0 0
  %755 = vmatmul.mubr.bf16.gmra.mrb[0].mxu0 %v626
  %v756 = vpop.f32.mrb[0].mxu0
  %v757 = vadd.f32 %v579, %v756
  %v758 = vpop.f32.mrb[0].mxu0
  %v759 = vpop.f32.mrb[0].mxu0
  %v760 = vadd.f32 %v579, %v759
  %v761 = vpop.f32.mrb[0].mxu0
  %762 = vmatprep.mubr.bf16.mxu0 0
  %763 = vmatmul.mubr.bf16.gmra.mrb[0].mxu0 %v629
  %v764 = vpop.f32.mrb[0].mxu0
  %v765 = vadd.f32 %v579, %v764
  %v766 = vpop.f32.mrb[0].mxu0
  %v767 = vpop.f32.mrb[0].mxu0
  %v768 = vadd.f32 %v579, %v767
  %v769 = vpop.f32.mrb[0].mxu0
  %770 = vmatprep.mubr.bf16.mxu0 0
  %771 = vmatmul.mubr.bf16.gmra.mrb[0].mxu0 %v632
  %v772 = vpop.f32.mrb[0].mxu0
  %v773 = vadd.f32 %v579, %v772
  %v774 = vpop.f32.mrb[0].mxu0
  %v775 = vpop.f32.mrb[0].mxu0
  %v776 = vpop.f32.mrb[0].mxu0
  %777 = vdwg.mxu0
  %v778 = vtanh.pop %v669
  %v779 = vtanh.pop %v672
  %v780 = vtanh.pop %v677
  %v781 = vtanh.pop %v680
  %v782 = vtanh.pop %v685
  %v783 = vtanh.pop %v688
  %v784 = vtanh.pop %v693
  %v785 = vtanh.pop %v696
  %v786 = vtanh.pop %v701
  %v787 = vtanh.pop %v704
  %v788 = vtanh.pop %v709
  %v789 = vtanh.pop %v712
  %v790 = vtanh.pop %v717
  %v791 = vtanh.pop %v720
  %v792 = vtanh.pop %v725
  %v793 = vtanh.pop %v728
  %v794 = vtanh.pop %v733
  %v795 = vtanh.pop %v736
  %v796 = vtanh.pop %v741
  %v797 = vtanh.pop %v744
  %v798 = vtanh.pop %v749
  %v799 = vtanh.pop %v752
  %v800 = vtanh.pop %v757
  %v801 = vtanh.pop %v760
  %v802 = vtanh.pop %v765
  %v803 = vtanh.pop %v768
  %v804 = vtanh.pop %v773
  %v805 = vpack.c.bf16 %v779, %v778
  %v806 = vpack.c.bf16 %v781, %v780
  %v807 = vpack.c.bf16 %v783, %v782
  %v808 = vpack.c.bf16 %v785, %v784
  %v809 = vpack.c.bf16 %v787, %v786
  %v810 = vpack.c.bf16 %v789, %v788
  %v811 = vpack.c.bf16 %v791, %v790
  %v812 = vpack.c.bf16 %v793, %v792
  %v813 = vpack.c.bf16 %v795, %v794
  %v814 = vpack.c.bf16 %v797, %v796
  %v815 = vpack.c.bf16 %v799, %v798
  %v816 = vpack.c.bf16 %v801, %v800
  %v817 = vpack.c.bf16 %v803, %v802
  %v818 = vpack.c.bf16 %v804, %v804
  %v819 = vld [vmem:[%s5] sm:$0xf]
  %v820 = vld [vmem:[%s5 + $0x4] sm:$0xf]
  %v821 = vld [vmem:[%s5 + $0x8] sm:$0xf]
  %v822 = vld [vmem:[%s5 + $0xc] sm:$0xf]
  %v823 = vlaneseq
  %v824 = vshrl.u32 %v823, 7
  %v825 = vsub.s32 0, %v824
  %v826 = vrot.slane %v39, %v825
  %v831 = vunpack.c.l.b16 %v819
  %v832 = vunpack.c.l.b16 %v820
  %v833 = vunpack.c.l.b16 %v821
  %v834 = vunpack.c.l.b16 %v822
  %v835 = vpack.c.b16 %v832, %v831
  %v836 = vpack.c.b16 %v834, %v833
  %v840 = vsel %vm344, %v805, 0
  %v843 = vsel %vm344, %v806, 0
  %v846 = vsel %vm344, %v807, 0
  %v849 = vsel %vm344, %v808, 0
  %v852 = vsel %vm344, %v809, 0
  %v855 = vsel %vm344, %v810, 0
  %v858 = vsel %vm344, %v811, 0
  %v861 = vsel %vm344, %v812, 0
  %v864 = vsel %vm344, %v813, 0
  %v867 = vsel %vm344, %v814, 0
  %v870 = vsel %vm344, %v815, 0
  %v873 = vsel %vm344, %v816, 0
  %v876 = vsel %vm344, %v817, 0
  %v879 = vsel %vm344, %v818, 0
  %881 = vmatprep.subr.bf16.mxu0 0
  %882 = vmatpush1.bf16.msra.mxu0 %v835
  %883 = vmatprep.subr.bf16.mxu0 0
  %884 = vmatpush1.bf16.msra.mxu0 %v836
  %885 = vmatprep.subr.bf16.mxu0 0
  %886 = vmatpush1.bf16.msra.mxu0 0
  %887 = vmatprep.subr.bf16.mxu0 0
  %888 = vmatpush1.bf16.msra.mxu0 0
  %889 = vmatprep.subr.bf16.mxu0 0
  %890 = vmatpush1.bf16.msra.mxu0 0
  %891 = vmatprep.subr.bf16.mxu0 0
  %892 = vmatpush1.bf16.msra.mxu0 0
  %893 = vmatprep.subr.bf16.mxu0 0
  %894 = vmatpush1.bf16.msra.mxu0 0
  %895 = vmatprep.subr.bf16.mxu0 0
  %896 = vmatpush1.bf16.msra.mxu0 0
  %897 = vmatprep.subr.bf16.mxu0 0
  %898 = vmatpush1.bf16.msra.mxu0 0
  %899 = vmatprep.subr.bf16.mxu0 0
  %900 = vmatpush1.bf16.msra.mxu0 0
  %901 = vmatprep.subr.bf16.mxu0 0
  %902 = vmatpush1.bf16.msra.mxu0 0
  %903 = vmatprep.subr.bf16.mxu0 0
  %904 = vmatpush1.bf16.msra.mxu0 0
  %905 = vmatprep.subr.bf16.mxu0 0
  %906 = vmatpush1.bf16.msra.mxu0 0
  %907 = vmatprep.subr.bf16.mxu0 0
  %908 = vmatpush1.bf16.msra.mxu0 0
  %909 = vmatprep.subr.bf16.mxu0 0
  %910 = vmatpush1.bf16.msra.mxu0 0
  %911 = vmatprep.subr.bf16.mxu0 0
  %912 = vmatpush1.bf16.msra.mxu0 0
  %913 = vmatprep.mubr.bf16.mxu0 0
  %914 = vmatmul.mubr.bf16.gmra.mrb[0].mxu0 %v840
  %v915 = vpop.f32.mrb[0].mxu0
  %v916 = vadd.f32 %v826, %v915
  %v917 = vpop.f32.mrb[0].mxu0
  %v918 = vpop.f32.mrb[0].mxu0
  %v919 = vadd.f32 %v826, %v918
  %v920 = vpop.f32.mrb[0].mxu0
  %921 = vmatprep.mubr.bf16.mxu0 0
  %922 = vmatmul.mubr.bf16.gmra.mrb[0].mxu0 %v843
  %v923 = vpop.f32.mrb[0].mxu0
  %v924 = vadd.f32 %v826, %v923
  %v925 = vpop.f32.mrb[0].mxu0
  %v926 = vpop.f32.mrb[0].mxu0
  %v927 = vadd.f32 %v826, %v926
  %v928 = vpop.f32.mrb[0].mxu0
  %929 = vmatprep.mubr.bf16.mxu0 0
  %930 = vmatmul.mubr.bf16.gmra.mrb[0].mxu0 %v846
  %v931 = vpop.f32.mrb[0].mxu0
  %v932 = vadd.f32 %v826, %v931
  %v933 = vpop.f32.mrb[0].mxu0
  %v934 = vpop.f32.mrb[0].mxu0
  %v935 = vadd.f32 %v826, %v934
  %v936 = vpop.f32.mrb[0].mxu0
  %937 = vmatprep.mubr.bf16.mxu0 0
  %938 = vmatmul.mubr.bf16.gmra.mrb[0].mxu0 %v849
  %v939 = vpop.f32.mrb[0].mxu0
  %v940 = vadd.f32 %v826, %v939
  %v941 = vpop.f32.mrb[0].mxu0
  %v942 = vpop.f32.mrb[0].mxu0
  %v943 = vadd.f32 %v826, %v942
  %v944 = vpop.f32.mrb[0].mxu0
  %945 = vmatprep.mubr.bf16.mxu0 0
  %946 = vmatmul.mubr.bf16.gmra.mrb[0].mxu0 %v852
  %v947 = vpop.f32.mrb[0].mxu0
  %v948 = vadd.f32 %v826, %v947
  %v949 = vpop.f32.mrb[0].mxu0
  %v950 = vpop.f32.mrb[0].mxu0
  %v951 = vadd.f32 %v826, %v950
  %v952 = vpop.f32.mrb[0].mxu0
  %953 = vmatprep.mubr.bf16.mxu0 0
  %954 = vmatmul.mubr.bf16.gmra.mrb[0].mxu0 %v855
  %v955 = vpop.f32.mrb[0].mxu0
  %v956 = vadd.f32 %v826, %v955
  %v957 = vpop.f32.mrb[0].mxu0
  %v958 = vpop.f32.mrb[0].mxu0
  %v959 = vadd.f32 %v826, %v958
  %v960 = vpop.f32.mrb[0].mxu0
  %961 = vmatprep.mubr.bf16.mxu0 0
  %962 = vmatmul.mubr.bf16.gmra.mrb[0].mxu0 %v858
  %v963 = vpop.f32.mrb[0].mxu0
  %v964 = vadd.f32 %v826, %v963
  %v965 = vpop.f32.mrb[0].mxu0
  %v966 = vpop.f32.mrb[0].mxu0
  %v967 = vadd.f32 %v826, %v966
  %v968 = vpop.f32.mrb[0].mxu0
  %969 = vmatprep.mubr.bf16.mxu0 0
  %970 = vmatmul.mubr.bf16.gmra.mrb[0].mxu0 %v861
  %v971 = vpop.f32.mrb[0].mxu0
  %v972 = vadd.f32 %v826, %v971
  %v973 = vpop.f32.mrb[0].mxu0
  %v974 = vpop.f32.mrb[0].mxu0
  %v975 = vadd.f32 %v826, %v974
  %v976 = vpop.f32.mrb[0].mxu0
  %977 = vmatprep.mubr.bf16.mxu0 0
  %978 = vmatmul.mubr.bf16.gmra.mrb[0].mxu0 %v864
  %v979 = vpop.f32.mrb[0].mxu0
  %v980 = vadd.f32 %v826, %v979
  %v981 = vpop.f32.mrb[0].mxu0
  %v982 = vpop.f32.mrb[0].mxu0
  %v983 = vadd.f32 %v826, %v982
  %v984 = vpop.f32.mrb[0].mxu0
  %985 = vmatprep.mubr.bf16.mxu0 0
  %986 = vmatmul.mubr.bf16.gmra.mrb[0].mxu0 %v867
  %v987 = vpop.f32.mrb[0].mxu0
  %v988 = vadd.f32 %v826, %v987
  %v989 = vpop.f32.mrb[0].mxu0
  %v990 = vpop.f32.mrb[0].mxu0
  %v991 = vadd.f32 %v826, %v990
  %v992 = vpop.f32.mrb[0].mxu0
  %993 = vmatprep.mubr.bf16.mxu0 0
  %994 = vmatmul.mubr.bf16.gmra.mrb[0].mxu0 %v870
  %v995 = vpop.f32.mrb[0].mxu0
  %v996 = vadd.f32 %v826, %v995
  %v997 = vpop.f32.mrb[0].mxu0
  %v998 = vpop.f32.mrb[0].mxu0
  %v999 = vadd.f32 %v826, %v998
  %v1000 = vpop.f32.mrb[0].mxu0
  %1001 = vmatprep.mubr.bf16.mxu0 0
  %1002 = vmatmul.mubr.bf16.gmra.mrb[0].mxu0 %v873
  %v1003 = vpop.f32.mrb[0].mxu0
  %v1004 = vadd.f32 %v826, %v1003
  %v1005 = vpop.f32.mrb[0].mxu0
  %v1006 = vpop.f32.mrb[0].mxu0
  %v1007 = vadd.f32 %v826, %v1006
  %v1008 = vpop.f32.mrb[0].mxu0
  %1009 = vmatprep.mubr.bf16.mxu0 0
  %1010 = vmatmul.mubr.bf16.gmra.mrb[0].mxu0 %v876
  %v1011 = vpop.f32.mrb[0].mxu0
  %v1012 = vadd.f32 %v826, %v1011
  %v1013 = vpop.f32.mrb[0].mxu0
  %v1014 = vpop.f32.mrb[0].mxu0
  %v1015 = vadd.f32 %v826, %v1014
  %v1016 = vpop.f32.mrb[0].mxu0
  %1017 = vmatprep.mubr.bf16.mxu0 0
  %1018 = vmatmul.mubr.bf16.gmra.mrb[0].mxu0 %v879
  %v1019 = vpop.f32.mrb[0].mxu0
  %v1020 = vadd.f32 %v826, %v1019
  %v1021 = vpop.f32.mrb[0].mxu0
  %v1022 = vpop.f32.mrb[0].mxu0
  %v1023 = vpop.f32.mrb[0].mxu0
  %1024 = vdwg.mxu0
  %v1025 = vlaneseq
  %v1026 = vand.u32 %v1025, 127
  %vm1027 = vcmp.lt.s32.totalorder %v1026, 4
  %v1028 = vsel %vm1027, %v916, 0.0
  %v1029 = vsel %vm1027, %v919, 0.0
  %v1030 = vsel %vm1027, %v924, 0.0
  %v1031 = vsel %vm1027, %v927, 0.0
  %v1032 = vsel %vm1027, %v932, 0.0
  %v1033 = vsel %vm1027, %v935, 0.0
  %v1034 = vsel %vm1027, %v940, 0.0
  %v1035 = vsel %vm1027, %v943, 0.0
  %v1036 = vsel %vm1027, %v948, 0.0
  %v1037 = vsel %vm1027, %v951, 0.0
  %v1038 = vsel %vm1027, %v956, 0.0
  %v1039 = vsel %vm1027, %v959, 0.0
  %v1040 = vsel %vm1027, %v964, 0.0
  %v1041 = vsel %vm1027, %v967, 0.0
  %v1042 = vsel %vm1027, %v972, 0.0
  %v1043 = vsel %vm1027, %v975, 0.0
  %v1044 = vsel %vm1027, %v980, 0.0
  %v1045 = vsel %vm1027, %v983, 0.0
  %v1046 = vsel %vm1027, %v988, 0.0
  %v1047 = vsel %vm1027, %v991, 0.0
  %v1048 = vsel %vm1027, %v996, 0.0
  %v1049 = vsel %vm1027, %v999, 0.0
  %v1050 = vsel %vm1027, %v1004, 0.0
  %v1051 = vsel %vm1027, %v1007, 0.0
  %v1052 = vsel %vm1027, %v1012, 0.0
  %v1053 = vsel %vm1027, %v1015, 0.0
  %v1054 = vsel %vm1027, %v1020, 0.0
  %vm1055 = vcmp.lt.s32.totalorder %v1026, 2
  %v1056 = vld [vmem:[%s1] sm:$0xff]
  %v1057 = vld [vmem:[%s1 + $0x8] sm:$0xff]
  %v1058 = vld [vmem:[%s1 + $0x10] sm:$0xff]
  %v1059 = vld [vmem:[%s1 + $0x18] sm:$0xff]
  %v1060 = vld [vmem:[%s1 + $0x20] sm:$0xff]
  %v1061 = vld [vmem:[%s1 + $0x28] sm:$0xff]
  %v1062 = vld [vmem:[%s1 + $0x30] sm:$0xff]
  %v1063 = vld [vmem:[%s1 + $0x38] sm:$0xff]
  %v1064 = vld [vmem:[%s1 + $0x40] sm:$0xff]
  %v1065 = vld [vmem:[%s1 + $0x48] sm:$0xff]
  %v1066 = vld [vmem:[%s1 + $0x50] sm:$0xff]
  %v1067 = vld [vmem:[%s1 + $0x58] sm:$0xff]
  %v1068 = vld [vmem:[%s1 + $0x60] sm:$0xff]
  %v1069 = vld [vmem:[%s1 + $0x68] sm:$0xff]
  %v1070 = vld [vmem:[%s1 + $0x70] sm:$0xff]
  %v1071 = vld [vmem:[%s1 + $0x78] sm:$0xff]
  %v1072 = vld [vmem:[%s1 + $0x80] sm:$0xff]
  %v1073 = vld [vmem:[%s1 + $0x88] sm:$0xff]
  %v1074 = vld [vmem:[%s1 + $0x90] sm:$0xff]
  %v1075 = vld [vmem:[%s1 + $0x98] sm:$0xff]
  %v1076 = vld [vmem:[%s1 + $0xa0] sm:$0xff]
  %v1077 = vld [vmem:[%s1 + $0xa8] sm:$0xff]
  %v1078 = vld [vmem:[%s1 + $0xb0] sm:$0xff]
  %v1079 = vld [vmem:[%s1 + $0xb8] sm:$0xff]
  %v1080 = vld [vmem:[%s1 + $0xc0] sm:$0xff]
  %v1081 = vld [vmem:[%s1 + $0xc8] sm:$0xff]
  %v1082 = vld [vmem:[%s1 + $0xd0] sm:$0x3f]
  %v1083 = vmul.f32 %v1028, 0.5
  %v1084 = vmul.f32 %v1029, 0.5
  %v1085 = vmul.f32 %v1030, 0.5
  %v1086 = vmul.f32 %v1031, 0.5
  %v1087 = vmul.f32 %v1032, 0.5
  %v1088 = vmul.f32 %v1033, 0.5
  %v1089 = vmul.f32 %v1034, 0.5
  %v1090 = vmul.f32 %v1035, 0.5
  %v1091 = vmul.f32 %v1036, 0.5
  %v1092 = vmul.f32 %v1037, 0.5
  %v1093 = vmul.f32 %v1038, 0.5
  %v1094 = vmul.f32 %v1039, 0.5
  %v1095 = vmul.f32 %v1040, 0.5
  %v1096 = vmul.f32 %v1041, 0.5
  %v1097 = vmul.f32 %v1042, 0.5
  %v1098 = vmul.f32 %v1043, 0.5
  %v1099 = vmul.f32 %v1044, 0.5
  %v1100 = vmul.f32 %v1045, 0.5
  %v1101 = vmul.f32 %v1046, 0.5
  %v1102 = vmul.f32 %v1047, 0.5
  %v1103 = vmul.f32 %v1048, 0.5
  %v1104 = vmul.f32 %v1049, 0.5
  %v1105 = vmul.f32 %v1050, 0.5
  %v1106 = vmul.f32 %v1051, 0.5
  %v1107 = vmul.f32 %v1052, 0.5
  %v1108 = vmul.f32 %v1053, 0.5
  %v1109 = vmul.f32 %v1054, 0.5
  %v1110 = vmul.f32 %v1083, 1.442695
  %v1111 = vpow.pop %v1110
  %v1112 = vmul.f32 %v1084, 1.442695
  %v1113 = vpow.pop %v1112
  %v1114 = vmul.f32 %v1085, 1.442695
  %v1115 = vpow.pop %v1114
  %v1116 = vmul.f32 %v1086, 1.442695
  %v1117 = vpow.pop %v1116
  %v1118 = vmul.f32 %v1087, 1.442695
  %v1119 = vpow.pop %v1118
  %v1120 = vmul.f32 %v1088, 1.442695
  %v1121 = vpow.pop %v1120
  %v1122 = vmul.f32 %v1089, 1.442695
  %v1123 = vpow.pop %v1122
  %v1124 = vmul.f32 %v1090, 1.442695
  %v1125 = vpow.pop %v1124
  %v1126 = vmul.f32 %v1091, 1.442695
  %v1127 = vpow.pop %v1126
  %v1128 = vmul.f32 %v1092, 1.442695
  %v1129 = vpow.pop %v1128
  %v1130 = vmul.f32 %v1093, 1.442695
  %v1131 = vpow.pop %v1130
  %v1132 = vmul.f32 %v1094, 1.442695
  %v1133 = vpow.pop %v1132
  %v1134 = vmul.f32 %v1095, 1.442695
  %v1135 = vpow.pop %v1134
  %v1136 = vmul.f32 %v1096, 1.442695
  %v1137 = vpow.pop %v1136
  %v1138 = vmul.f32 %v1097, 1.442695
  %v1139 = vpow.pop %v1138
  %v1140 = vmul.f32 %v1098, 1.442695
  %v1141 = vpow.pop %v1140
  %v1142 = vmul.f32 %v1099, 1.442695
  %v1143 = vpow.pop %v1142
  %v1144 = vmul.f32 %v1100, 1.442695
  %v1145 = vpow.pop %v1144
  %v1146 = vmul.f32 %v1101, 1.442695
  %v1147 = vpow.pop %v1146
  %v1148 = vmul.f32 %v1102, 1.442695
  %v1149 = vpow.pop %v1148
  %v1150 = vmul.f32 %v1103, 1.442695
  %v1151 = vpow.pop %v1150
  %v1152 = vmul.f32 %v1104, 1.442695
  %v1153 = vpow.pop %v1152
  %v1154 = vmul.f32 %v1105, 1.442695
  %v1155 = vpow.pop %v1154
  %v1156 = vmul.f32 %v1106, 1.442695
  %v1157 = vpow.pop %v1156
  %v1158 = vmul.f32 %v1107, 1.442695
  %v1159 = vpow.pop %v1158
  %v1160 = vmul.f32 %v1108, 1.442695
  %v1161 = vpow.pop %v1160
  %v1162 = vmul.f32 %v1109, 1.442695
  %v1163 = vpow.pop %v1162
  %v1164 = vmul.f32 %v1056, %v1111
  %v1165 = vmul.f32 %v1057, %v1113
  %v1166 = vmul.f32 %v1058, %v1115
  %v1167 = vmul.f32 %v1059, %v1117
  %v1168 = vmul.f32 %v1060, %v1119
  %v1169 = vmul.f32 %v1061, %v1121
  %v1170 = vmul.f32 %v1062, %v1123
  %v1171 = vmul.f32 %v1063, %v1125
  %v1172 = vmul.f32 %v1064, %v1127
  %v1173 = vmul.f32 %v1065, %v1129
  %v1174 = vmul.f32 %v1066, %v1131
  %v1175 = vmul.f32 %v1067, %v1133
  %v1176 = vmul.f32 %v1068, %v1135
  %v1177 = vmul.f32 %v1069, %v1137
  %v1178 = vmul.f32 %v1070, %v1139
  %v1179 = vmul.f32 %v1071, %v1141
  %v1180 = vmul.f32 %v1072, %v1143
  %v1181 = vmul.f32 %v1073, %v1145
  %v1182 = vmul.f32 %v1074, %v1147
  %v1183 = vmul.f32 %v1075, %v1149
  %v1184 = vmul.f32 %v1076, %v1151
  %v1185 = vmul.f32 %v1077, %v1153
  %v1186 = vmul.f32 %v1078, %v1155
  %v1187 = vmul.f32 %v1079, %v1157
  %v1188 = vmul.f32 %v1080, %v1159
  %v1189 = vmul.f32 %v1081, %v1161
  %v1190 = vmul.f32 %v1082, %v1163
  %v1191 = vsel %vm1055, %v1028, %v1164
  %v1192 = vsel %vm1055, %v1029, %v1165
  %v1193 = vsel %vm1055, %v1030, %v1166
  %v1194 = vsel %vm1055, %v1031, %v1167
  %v1195 = vsel %vm1055, %v1032, %v1168
  %v1196 = vsel %vm1055, %v1033, %v1169
  %v1197 = vsel %vm1055, %v1034, %v1170
  %v1198 = vsel %vm1055, %v1035, %v1171
  %v1199 = vsel %vm1055, %v1036, %v1172
  %v1200 = vsel %vm1055, %v1037, %v1173
  %v1201 = vsel %vm1055, %v1038, %v1174
  %v1202 = vsel %vm1055, %v1039, %v1175
  %v1203 = vsel %vm1055, %v1040, %v1176
  %v1204 = vsel %vm1055, %v1041, %v1177
  %v1205 = vsel %vm1055, %v1042, %v1178
  %v1206 = vsel %vm1055, %v1043, %v1179
  %v1207 = vsel %vm1055, %v1044, %v1180
  %v1208 = vsel %vm1055, %v1045, %v1181
  %v1209 = vsel %vm1055, %v1046, %v1182
  %v1210 = vsel %vm1055, %v1047, %v1183
  %v1211 = vsel %vm1055, %v1048, %v1184
  %v1212 = vsel %vm1055, %v1049, %v1185
  %v1213 = vsel %vm1055, %v1050, %v1186
  %v1214 = vsel %vm1055, %v1051, %v1187
  %v1215 = vsel %vm1055, %v1052, %v1188
  %v1216 = vsel %vm1055, %v1053, %v1189
  %v1217 = vsel %vm1055, %v1054, %v1190
  %v1218 = vpack.c.bf16 %v1192, %v1191
  %v1219 = vpack.c.bf16 %v1194, %v1193
  %v1220 = vpack.c.bf16 %v1196, %v1195
  %v1221 = vpack.c.bf16 %v1198, %v1197
  %v1222 = vpack.c.bf16 %v1200, %v1199
  %v1223 = vpack.c.bf16 %v1202, %v1201
  %v1224 = vpack.c.bf16 %v1204, %v1203
  %v1225 = vpack.c.bf16 %v1206, %v1205
  %v1226 = vpack.c.bf16 %v1208, %v1207
  %v1227 = vpack.c.bf16 %v1210, %v1209
  %v1228 = vpack.c.bf16 %v1212, %v1211
  %v1229 = vpack.c.bf16 %v1214, %v1213
  %v1230 = vpack.c.bf16 %v1216, %v1215
  %v1231 = vpack.c.bf16 %v1217, %v1217
  %v1232 = vld [vmem:[%s6] sm:$0xf]
  %v1233 = vld [vmem:[%s6 + $0x4] sm:$0xf]
  %v1234 = vld [vmem:[%s6 + $0x8] sm:$0xf]
  %v1235 = vld [vmem:[%s6 + $0xc] sm:$0xf]
  %v1236 = vld [vmem:[%s6 + $0x10] sm:$0xf]
  %v1237 = vld [vmem:[%s6 + $0x14] sm:$0xf]
  %v1238 = vld [vmem:[%s6 + $0x18] sm:$0xf]
  %v1239 = vld [vmem:[%s6 + $0x1c] sm:$0xf]
  %v1240 = vld [vmem:[%s6 + $0x20] sm:$0xf]
  %v1241 = vld [vmem:[%s6 + $0x24] sm:$0xf]
  %v1242 = vld [vmem:[%s6 + $0x28] sm:$0xf]
  %v1243 = vld [vmem:[%s6 + $0x2c] sm:$0xf]
  %v1244 = vld [vmem:[%s6 + $0x30] sm:$0xf]
  %v1245 = vld [vmem:[%s6 + $0x34] sm:$0xf]
  %v1246 = vld [vmem:[%s6 + $0x38] sm:$0xf]
  %v1247 = vld [vmem:[%s6 + $0x3c] sm:$0xf]
  %v1248 = vlaneseq
  %v1249 = vshrl.u32 %v1248, 7
  %v1250 = vsub.s32 0, %v1249
  %v1251 = vrot.slane %v40, %v1250
  %v1268 = vunpack.c.l.b16 %v1232
  %v1269 = vunpack.c.l.b16 %v1233
  %v1270 = vunpack.c.l.b16 %v1234
  %v1271 = vunpack.c.l.b16 %v1235
  %v1272 = vunpack.c.l.b16 %v1236
  %v1273 = vunpack.c.l.b16 %v1237
  %v1274 = vunpack.c.l.b16 %v1238
  %v1275 = vunpack.c.l.b16 %v1239
  %v1276 = vunpack.c.l.b16 %v1240
  %v1277 = vunpack.c.l.b16 %v1241
  %v1278 = vunpack.c.l.b16 %v1242
  %v1279 = vunpack.c.l.b16 %v1243
  %v1280 = vunpack.c.l.b16 %v1244
  %v1281 = vunpack.c.l.b16 %v1245
  %v1282 = vunpack.c.l.b16 %v1246
  %v1283 = vunpack.c.l.b16 %v1247
  %v1284 = vpack.c.b16 %v1269, %v1268
  %v1285 = vpack.c.b16 %v1271, %v1270
  %v1286 = vpack.c.b16 %v1273, %v1272
  %v1287 = vpack.c.b16 %v1275, %v1274
  %v1288 = vpack.c.b16 %v1277, %v1276
  %v1289 = vpack.c.b16 %v1279, %v1278
  %v1290 = vpack.c.b16 %v1281, %v1280
  %v1291 = vpack.c.b16 %v1283, %v1282
  %1300 = vmatprep.subr.bf16.mxu0 0
  %1301 = vmatpush1.bf16.msra.mxu0 %v1284
  %1302 = vmatprep.subr.bf16.mxu0 0
  %1303 = vmatpush1.bf16.msra.mxu0 %v1285
  %1304 = vmatprep.subr.bf16.mxu0 0
  %1305 = vmatpush1.bf16.msra.mxu0 %v1286
  %1306 = vmatprep.subr.bf16.mxu0 0
  %1307 = vmatpush1.bf16.msra.mxu0 %v1287
  %1308 = vmatprep.subr.bf16.mxu0 0
  %1309 = vmatpush1.bf16.msra.mxu0 %v1288
  %1310 = vmatprep.subr.bf16.mxu0 0
  %1311 = vmatpush1.bf16.msra.mxu0 %v1289
  %1312 = vmatprep.subr.bf16.mxu0 0
  %1313 = vmatpush1.bf16.msra.mxu0 %v1290
  %1314 = vmatprep.subr.bf16.mxu0 0
  %1315 = vmatpush1.bf16.msra.mxu0 %v1291
  %1316 = vmatprep.subr.bf16.mxu0 0
  %1317 = vmatpush1.bf16.msra.mxu0 0
  %1318 = vmatprep.subr.bf16.mxu0 0
  %1319 = vmatpush1.bf16.msra.mxu0 0
  %1320 = vmatprep.subr.bf16.mxu0 0
  %1321 = vmatpush1.bf16.msra.mxu0 0
  %1322 = vmatprep.subr.bf16.mxu0 0
  %1323 = vmatpush1.bf16.msra.mxu0 0
  %1324 = vmatprep.subr.bf16.mxu0 0
  %1325 = vmatpush1.bf16.msra.mxu0 0
  %1326 = vmatprep.subr.bf16.mxu0 0
  %1327 = vmatpush1.bf16.msra.mxu0 0
  %1328 = vmatprep.subr.bf16.mxu0 0
  %1329 = vmatpush1.bf16.msra.mxu0 0
  %1330 = vmatprep.subr.bf16.mxu0 0
  %1331 = vmatpush1.bf16.msra.mxu0 0
  %1332 = vmatprep.mubr.bf16.mxu0 0
  %1333 = vmatmul.mubr.bf16.gmra.mrb[0].mxu0 %v1218
  %v1334 = vpop.f32.mrb[0].mxu0
  %v1335 = vadd.f32 %v1251, %v1334
  %v1336 = vpop.f32.mrb[0].mxu0
  %v1337 = vpop.f32.mrb[0].mxu0
  %v1338 = vadd.f32 %v1251, %v1337
  %v1339 = vpop.f32.mrb[0].mxu0
  %1340 = vmatprep.mubr.bf16.mxu0 0
  %1341 = vmatmul.mubr.bf16.gmra.mrb[0].mxu0 %v1219
  %v1342 = vpop.f32.mrb[0].mxu0
  %v1343 = vadd.f32 %v1251, %v1342
  %v1344 = vpop.f32.mrb[0].mxu0
  %v1345 = vpop.f32.mrb[0].mxu0
  %v1346 = vadd.f32 %v1251, %v1345
  %v1347 = vpop.f32.mrb[0].mxu0
  %1348 = vmatprep.mubr.bf16.mxu0 0
  %1349 = vmatmul.mubr.bf16.gmra.mrb[0].mxu0 %v1220
  %v1350 = vpop.f32.mrb[0].mxu0
  %v1351 = vadd.f32 %v1251, %v1350
  %v1352 = vpop.f32.mrb[0].mxu0
  %v1353 = vpop.f32.mrb[0].mxu0
  %v1354 = vadd.f32 %v1251, %v1353
  %v1355 = vpop.f32.mrb[0].mxu0
  %1356 = vmatprep.mubr.bf16.mxu0 0
  %1357 = vmatmul.mubr.bf16.gmra.mrb[0].mxu0 %v1221
  %v1358 = vpop.f32.mrb[0].mxu0
  %v1359 = vadd.f32 %v1251, %v1358
  %v1360 = vpop.f32.mrb[0].mxu0
  %v1361 = vpop.f32.mrb[0].mxu0
  %v1362 = vadd.f32 %v1251, %v1361
  %v1363 = vpop.f32.mrb[0].mxu0
  %1364 = vmatprep.mubr.bf16.mxu0 0
  %1365 = vmatmul.mubr.bf16.gmra.mrb[0].mxu0 %v1222
  %v1366 = vpop.f32.mrb[0].mxu0
  %v1367 = vadd.f32 %v1251, %v1366
  %v1368 = vpop.f32.mrb[0].mxu0
  %v1369 = vpop.f32.mrb[0].mxu0
  %v1370 = vadd.f32 %v1251, %v1369
  %v1371 = vpop.f32.mrb[0].mxu0
  %1372 = vmatprep.mubr.bf16.mxu0 0
  %1373 = vmatmul.mubr.bf16.gmra.mrb[0].mxu0 %v1223
  %v1374 = vpop.f32.mrb[0].mxu0
  %v1375 = vadd.f32 %v1251, %v1374
  %v1376 = vpop.f32.mrb[0].mxu0
  %v1377 = vpop.f32.mrb[0].mxu0
  %v1378 = vadd.f32 %v1251, %v1377
  %v1379 = vpop.f32.mrb[0].mxu0
  %1380 = vmatprep.mubr.bf16.mxu0 0
  %1381 = vmatmul.mubr.bf16.gmra.mrb[0].mxu0 %v1224
  %v1382 = vpop.f32.mrb[0].mxu0
  %v1383 = vadd.f32 %v1251, %v1382
  %v1384 = vpop.f32.mrb[0].mxu0
  %v1385 = vpop.f32.mrb[0].mxu0
  %v1386 = vadd.f32 %v1251, %v1385
  %v1387 = vpop.f32.mrb[0].mxu0
  %1388 = vmatprep.mubr.bf16.mxu0 0
  %1389 = vmatmul.mubr.bf16.gmra.mrb[0].mxu0 %v1225
  %v1390 = vpop.f32.mrb[0].mxu0
  %v1391 = vadd.f32 %v1251, %v1390
  %v1392 = vpop.f32.mrb[0].mxu0
  %v1393 = vpop.f32.mrb[0].mxu0
  %v1394 = vadd.f32 %v1251, %v1393
  %v1395 = vpop.f32.mrb[0].mxu0
  %1396 = vmatprep.mubr.bf16.mxu0 0
  %1397 = vmatmul.mubr.bf16.gmra.mrb[0].mxu0 %v1226
  %v1398 = vpop.f32.mrb[0].mxu0
  %v1399 = vadd.f32 %v1251, %v1398
  %v1400 = vpop.f32.mrb[0].mxu0
  %v1401 = vpop.f32.mrb[0].mxu0
  %v1402 = vadd.f32 %v1251, %v1401
  %v1403 = vpop.f32.mrb[0].mxu0
  %1404 = vmatprep.mubr.bf16.mxu0 0
  %1405 = vmatmul.mubr.bf16.gmra.mrb[0].mxu0 %v1227
  %v1406 = vpop.f32.mrb[0].mxu0
  %v1407 = vadd.f32 %v1251, %v1406
  %v1408 = vpop.f32.mrb[0].mxu0
  %v1409 = vpop.f32.mrb[0].mxu0
  %v1410 = vadd.f32 %v1251, %v1409
  %v1411 = vpop.f32.mrb[0].mxu0
  %1412 = vmatprep.mubr.bf16.mxu0 0
  %1413 = vmatmul.mubr.bf16.gmra.mrb[0].mxu0 %v1228
  %v1414 = vpop.f32.mrb[0].mxu0
  %v1415 = vadd.f32 %v1251, %v1414
  %v1416 = vpop.f32.mrb[0].mxu0
  %v1417 = vpop.f32.mrb[0].mxu0
  %v1418 = vadd.f32 %v1251, %v1417
  %v1419 = vpop.f32.mrb[0].mxu0
  %1420 = vmatprep.mubr.bf16.mxu0 0
  %1421 = vmatmul.mubr.bf16.gmra.mrb[0].mxu0 %v1229
  %v1422 = vpop.f32.mrb[0].mxu0
  %v1423 = vadd.f32 %v1251, %v1422
  %v1424 = vpop.f32.mrb[0].mxu0
  %v1425 = vpop.f32.mrb[0].mxu0
  %v1426 = vadd.f32 %v1251, %v1425
  %v1427 = vpop.f32.mrb[0].mxu0
  %1428 = vmatprep.mubr.bf16.mxu0 0
  %1429 = vmatmul.mubr.bf16.gmra.mrb[0].mxu0 %v1230
  %v1430 = vpop.f32.mrb[0].mxu0
  %v1431 = vadd.f32 %v1251, %v1430
  %v1432 = vpop.f32.mrb[0].mxu0
  %v1433 = vpop.f32.mrb[0].mxu0
  %v1434 = vadd.f32 %v1251, %v1433
  %v1435 = vpop.f32.mrb[0].mxu0
  %1436 = vmatprep.mubr.bf16.mxu0 0
  %1437 = vmatmul.mubr.bf16.gmra.mrb[0].mxu0 %v1231
  %v1438 = vpop.f32.mrb[0].mxu0
  %v1439 = vadd.f32 %v1251, %v1438
  %v1440 = vpop.f32.mrb[0].mxu0
  %v1441 = vpop.f32.mrb[0].mxu0
  %v1442 = vpop.f32.mrb[0].mxu0
  %1443 = vdwg.mxu0
  %v1444 = vtanh.pop %v1335
  %v1445 = vtanh.pop %v1338
  %v1446 = vtanh.pop %v1343
  %v1447 = vtanh.pop %v1346
  %v1448 = vtanh.pop %v1351
  %v1449 = vtanh.pop %v1354
  %v1450 = vtanh.pop %v1359
  %v1451 = vtanh.pop %v1362
  %v1452 = vtanh.pop %v1367
  %v1453 = vtanh.pop %v1370
  %v1454 = vtanh.pop %v1375
  %v1455 = vtanh.pop %v1378
  %v1456 = vtanh.pop %v1383
  %v1457 = vtanh.pop %v1386
  %v1458 = vtanh.pop %v1391
  %v1459 = vtanh.pop %v1394
  %v1460 = vtanh.pop %v1399
  %v1461 = vtanh.pop %v1402
  %v1462 = vtanh.pop %v1407
  %v1463 = vtanh.pop %v1410
  %v1464 = vtanh.pop %v1415
  %v1465 = vtanh.pop %v1418
  %v1466 = vtanh.pop %v1423
  %v1467 = vtanh.pop %v1426
  %v1468 = vtanh.pop %v1431
  %v1469 = vtanh.pop %v1434
  %v1470 = vtanh.pop %v1439
  %v1471 = vpack.c.bf16 %v1445, %v1444
  %v1472 = vpack.c.bf16 %v1447, %v1446
  %v1473 = vpack.c.bf16 %v1449, %v1448
  %v1474 = vpack.c.bf16 %v1451, %v1450
  %v1475 = vpack.c.bf16 %v1453, %v1452
  %v1476 = vpack.c.bf16 %v1455, %v1454
  %v1477 = vpack.c.bf16 %v1457, %v1456
  %v1478 = vpack.c.bf16 %v1459, %v1458
  %v1479 = vpack.c.bf16 %v1461, %v1460
  %v1480 = vpack.c.bf16 %v1463, %v1462
  %v1481 = vpack.c.bf16 %v1465, %v1464
  %v1482 = vpack.c.bf16 %v1467, %v1466
  %v1483 = vpack.c.bf16 %v1469, %v1468
  %v1484 = vpack.c.bf16 %v1470, %v1470
  %v1485 = vld [vmem:[%s7] sm:$0xf]
  %v1486 = vld [vmem:[%s7 + $0x4] sm:$0xf]
  %v1487 = vld [vmem:[%s7 + $0x8] sm:$0xf]
  %v1488 = vld [vmem:[%s7 + $0xc] sm:$0xf]
  %v1489 = vlaneseq
  %v1490 = vshrl.u32 %v1489, 7
  %v1491 = vsub.s32 0, %v1490
  %v1492 = vrot.slane %v41, %v1491
  %v1497 = vunpack.c.l.b16 %v1485
  %v1498 = vunpack.c.l.b16 %v1486
  %v1499 = vunpack.c.l.b16 %v1487
  %v1500 = vunpack.c.l.b16 %v1488
  %v1501 = vpack.c.b16 %v1498, %v1497
  %v1502 = vpack.c.b16 %v1500, %v1499
  %v1506 = vsel %vm344, %v1471, 0
  %v1509 = vsel %vm344, %v1472, 0
  %v1512 = vsel %vm344, %v1473, 0
  %v1515 = vsel %vm344, %v1474, 0
  %v1518 = vsel %vm344, %v1475, 0
  %v1521 = vsel %vm344, %v1476, 0
  %v1524 = vsel %vm344, %v1477, 0
  %v1527 = vsel %vm344, %v1478, 0
  %v1530 = vsel %vm344, %v1479, 0
  %v1533 = vsel %vm344, %v1480, 0
  %v1536 = vsel %vm344, %v1481, 0
  %v1539 = vsel %vm344, %v1482, 0
  %v1542 = vsel %vm344, %v1483, 0
  %v1545 = vsel %vm344, %v1484, 0
  %1547 = vmatprep.subr.bf16.mxu0 0
  %1548 = vmatpush1.bf16.msra.mxu0 %v1501
  %1549 = vmatprep.subr.bf16.mxu0 0
  %1550 = vmatpush1.bf16.msra.mxu0 %v1502
  %1551 = vmatprep.subr.bf16.mxu0 0
  %1552 = vmatpush1.bf16.msra.mxu0 0
  %1553 = vmatprep.subr.bf16.mxu0 0
  %1554 = vmatpush1.bf16.msra.mxu0 0
  %1555 = vmatprep.subr.bf16.mxu0 0
  %1556 = vmatpush1.bf16.msra.mxu0 0
  %1557 = vmatprep.subr.bf16.mxu0 0
  %1558 = vmatpush1.bf16.msra.mxu0 0
  %1559 = vmatprep.subr.bf16.mxu0 0
  %1560 = vmatpush1.bf16.msra.mxu0 0
  %1561 = vmatprep.subr.bf16.mxu0 0
  %1562 = vmatpush1.bf16.msra.mxu0 0
  %1563 = vmatprep.subr.bf16.mxu0 0
  %1564 = vmatpush1.bf16.msra.mxu0 0
  %1565 = vmatprep.subr.bf16.mxu0 0
  %1566 = vmatpush1.bf16.msra.mxu0 0
  %1567 = vmatprep.subr.bf16.mxu0 0
  %1568 = vmatpush1.bf16.msra.mxu0 0
  %1569 = vmatprep.subr.bf16.mxu0 0
  %1570 = vmatpush1.bf16.msra.mxu0 0
  %1571 = vmatprep.subr.bf16.mxu0 0
  %1572 = vmatpush1.bf16.msra.mxu0 0
  %1573 = vmatprep.subr.bf16.mxu0 0
  %1574 = vmatpush1.bf16.msra.mxu0 0
  %1575 = vmatprep.subr.bf16.mxu0 0
  %1576 = vmatpush1.bf16.msra.mxu0 0
  %1577 = vmatprep.subr.bf16.mxu0 0
  %1578 = vmatpush1.bf16.msra.mxu0 0
  %1579 = vmatprep.mubr.bf16.mxu0 0
  %1580 = vmatmul.mubr.bf16.gmra.mrb[0].mxu0 %v1506
  %v1581 = vpop.f32.mrb[0].mxu0
  %v1582 = vadd.f32 %v1492, %v1581
  %v1583 = vpop.f32.mrb[0].mxu0
  %v1584 = vpop.f32.mrb[0].mxu0
  %v1585 = vadd.f32 %v1492, %v1584
  %v1586 = vpop.f32.mrb[0].mxu0
  %1587 = vmatprep.mubr.bf16.mxu0 0
  %1588 = vmatmul.mubr.bf16.gmra.mrb[0].mxu0 %v1509
  %v1589 = vpop.f32.mrb[0].mxu0
  %v1590 = vadd.f32 %v1492, %v1589
  %v1591 = vpop.f32.mrb[0].mxu0
  %v1592 = vpop.f32.mrb[0].mxu0
  %v1593 = vadd.f32 %v1492, %v1592
  %v1594 = vpop.f32.mrb[0].mxu0
  %1595 = vmatprep.mubr.bf16.mxu0 0
  %1596 = vmatmul.mubr.bf16.gmra.mrb[0].mxu0 %v1512
  %v1597 = vpop.f32.mrb[0].mxu0
  %v1598 = vadd.f32 %v1492, %v1597
  %v1599 = vpop.f32.mrb[0].mxu0
  %v1600 = vpop.f32.mrb[0].mxu0
  %v1601 = vadd.f32 %v1492, %v1600
  %v1602 = vpop.f32.mrb[0].mxu0
  %1603 = vmatprep.mubr.bf16.mxu0 0
  %1604 = vmatmul.mubr.bf16.gmra.mrb[0].mxu0 %v1515
  %v1605 = vpop.f32.mrb[0].mxu0
  %v1606 = vadd.f32 %v1492, %v1605
  %v1607 = vpop.f32.mrb[0].mxu0
  %v1608 = vpop.f32.mrb[0].mxu0
  %v1609 = vadd.f32 %v1492, %v1608
  %v1610 = vpop.f32.mrb[0].mxu0
  %1611 = vmatprep.mubr.bf16.mxu0 0
  %1612 = vmatmul.mubr.bf16.gmra.mrb[0].mxu0 %v1518
  %v1613 = vpop.f32.mrb[0].mxu0
  %v1614 = vadd.f32 %v1492, %v1613
  %v1615 = vpop.f32.mrb[0].mxu0
  %v1616 = vpop.f32.mrb[0].mxu0
  %v1617 = vadd.f32 %v1492, %v1616
  %v1618 = vpop.f32.mrb[0].mxu0
  %1619 = vmatprep.mubr.bf16.mxu0 0
  %1620 = vmatmul.mubr.bf16.gmra.mrb[0].mxu0 %v1521
  %v1621 = vpop.f32.mrb[0].mxu0
  %v1622 = vadd.f32 %v1492, %v1621
  %v1623 = vpop.f32.mrb[0].mxu0
  %v1624 = vpop.f32.mrb[0].mxu0
  %v1625 = vadd.f32 %v1492, %v1624
  %v1626 = vpop.f32.mrb[0].mxu0
  %1627 = vmatprep.mubr.bf16.mxu0 0
  %1628 = vmatmul.mubr.bf16.gmra.mrb[0].mxu0 %v1524
  %v1629 = vpop.f32.mrb[0].mxu0
  %v1630 = vadd.f32 %v1492, %v1629
  %v1631 = vpop.f32.mrb[0].mxu0
  %v1632 = vpop.f32.mrb[0].mxu0
  %v1633 = vadd.f32 %v1492, %v1632
  %v1634 = vpop.f32.mrb[0].mxu0
  %1635 = vmatprep.mubr.bf16.mxu0 0
  %1636 = vmatmul.mubr.bf16.gmra.mrb[0].mxu0 %v1527
  %v1637 = vpop.f32.mrb[0].mxu0
  %v1638 = vadd.f32 %v1492, %v1637
  %v1639 = vpop.f32.mrb[0].mxu0
  %v1640 = vpop.f32.mrb[0].mxu0
  %v1641 = vadd.f32 %v1492, %v1640
  %v1642 = vpop.f32.mrb[0].mxu0
  %1643 = vmatprep.mubr.bf16.mxu0 0
  %1644 = vmatmul.mubr.bf16.gmra.mrb[0].mxu0 %v1530
  %v1645 = vpop.f32.mrb[0].mxu0
  %v1646 = vadd.f32 %v1492, %v1645
  %v1647 = vpop.f32.mrb[0].mxu0
  %v1648 = vpop.f32.mrb[0].mxu0
  %v1649 = vadd.f32 %v1492, %v1648
  %v1650 = vpop.f32.mrb[0].mxu0
  %1651 = vmatprep.mubr.bf16.mxu0 0
  %1652 = vmatmul.mubr.bf16.gmra.mrb[0].mxu0 %v1533
  %v1653 = vpop.f32.mrb[0].mxu0
  %v1654 = vadd.f32 %v1492, %v1653
  %v1655 = vpop.f32.mrb[0].mxu0
  %v1656 = vpop.f32.mrb[0].mxu0
  %v1657 = vadd.f32 %v1492, %v1656
  %v1658 = vpop.f32.mrb[0].mxu0
  %1659 = vmatprep.mubr.bf16.mxu0 0
  %1660 = vmatmul.mubr.bf16.gmra.mrb[0].mxu0 %v1536
  %v1661 = vpop.f32.mrb[0].mxu0
  %v1662 = vadd.f32 %v1492, %v1661
  %v1663 = vpop.f32.mrb[0].mxu0
  %v1664 = vpop.f32.mrb[0].mxu0
  %v1665 = vadd.f32 %v1492, %v1664
  %v1666 = vpop.f32.mrb[0].mxu0
  %1667 = vmatprep.mubr.bf16.mxu0 0
  %1668 = vmatmul.mubr.bf16.gmra.mrb[0].mxu0 %v1539
  %v1669 = vpop.f32.mrb[0].mxu0
  %v1670 = vadd.f32 %v1492, %v1669
  %v1671 = vpop.f32.mrb[0].mxu0
  %v1672 = vpop.f32.mrb[0].mxu0
  %v1673 = vadd.f32 %v1492, %v1672
  %v1674 = vpop.f32.mrb[0].mxu0
  %1675 = vmatprep.mubr.bf16.mxu0 0
  %1676 = vmatmul.mubr.bf16.gmra.mrb[0].mxu0 %v1542
  %v1677 = vpop.f32.mrb[0].mxu0
  %v1678 = vadd.f32 %v1492, %v1677
  %v1679 = vpop.f32.mrb[0].mxu0
  %v1680 = vpop.f32.mrb[0].mxu0
  %v1681 = vadd.f32 %v1492, %v1680
  %v1682 = vpop.f32.mrb[0].mxu0
  %1683 = vmatprep.mubr.bf16.mxu0 0
  %1684 = vmatmul.mubr.bf16.gmra.mrb[0].mxu0 %v1545
  %v1685 = vpop.f32.mrb[0].mxu0
  %v1686 = vadd.f32 %v1492, %v1685
  %v1687 = vpop.f32.mrb[0].mxu0
  %v1688 = vpop.f32.mrb[0].mxu0
  %v1689 = vpop.f32.mrb[0].mxu0
  %1690 = vdwg.mxu0
  %v1691 = vtanh.pop %v1582
  %v1692 = vtanh.pop %v1585
  %v1693 = vtanh.pop %v1590
  %v1694 = vtanh.pop %v1593
  %v1695 = vtanh.pop %v1598
  %v1696 = vtanh.pop %v1601
  %v1697 = vtanh.pop %v1606
  %v1698 = vtanh.pop %v1609
  %v1699 = vtanh.pop %v1614
  %v1700 = vtanh.pop %v1617
  %v1701 = vtanh.pop %v1622
  %v1702 = vtanh.pop %v1625
  %v1703 = vtanh.pop %v1630
  %v1704 = vtanh.pop %v1633
  %v1705 = vtanh.pop %v1638
  %v1706 = vtanh.pop %v1641
  %v1707 = vtanh.pop %v1646
  %v1708 = vtanh.pop %v1649
  %v1709 = vtanh.pop %v1654
  %v1710 = vtanh.pop %v1657
  %v1711 = vtanh.pop %v1662
  %v1712 = vtanh.pop %v1665
  %v1713 = vtanh.pop %v1670
  %v1714 = vtanh.pop %v1673
  %v1715 = vtanh.pop %v1678
  %v1716 = vtanh.pop %v1681
  %v1717 = vtanh.pop %v1686
  %v1718 = vpack.c.bf16 %v1692, %v1691
  %v1719 = vpack.c.bf16 %v1694, %v1693
  %v1720 = vpack.c.bf16 %v1696, %v1695
  %v1721 = vpack.c.bf16 %v1698, %v1697
  %v1722 = vpack.c.bf16 %v1700, %v1699
  %v1723 = vpack.c.bf16 %v1702, %v1701
  %v1724 = vpack.c.bf16 %v1704, %v1703
  %v1725 = vpack.c.bf16 %v1706, %v1705
  %v1726 = vpack.c.bf16 %v1708, %v1707
  %v1727 = vpack.c.bf16 %v1710, %v1709
  %v1728 = vpack.c.bf16 %v1712, %v1711
  %v1729 = vpack.c.bf16 %v1714, %v1713
  %v1730 = vpack.c.bf16 %v1716, %v1715
  %v1731 = vpack.c.bf16 %v1717, %v1717
  %v1732 = vld [vmem:[%s8] sm:$0xf]
  %v1733 = vld [vmem:[%s8 + $0x4] sm:$0xf]
  %v1734 = vld [vmem:[%s8 + $0x8] sm:$0xf]
  %v1735 = vld [vmem:[%s8 + $0xc] sm:$0xf]
  %v1736 = vlaneseq
  %v1737 = vshrl.u32 %v1736, 7
  %v1738 = vsub.s32 0, %v1737
  %v1739 = vrot.slane %v42, %v1738
  %v1744 = vunpack.c.l.b16 %v1732
  %v1745 = vunpack.c.l.b16 %v1733
  %v1746 = vunpack.c.l.b16 %v1734
  %v1747 = vunpack.c.l.b16 %v1735
  %v1748 = vpack.c.b16 %v1745, %v1744
  %v1749 = vpack.c.b16 %v1747, %v1746
  %v1753 = vsel %vm344, %v1718, 0
  %v1756 = vsel %vm344, %v1719, 0
  %v1759 = vsel %vm344, %v1720, 0
  %v1762 = vsel %vm344, %v1721, 0
  %v1765 = vsel %vm344, %v1722, 0
  %v1768 = vsel %vm344, %v1723, 0
  %v1771 = vsel %vm344, %v1724, 0
  %v1774 = vsel %vm344, %v1725, 0
  %v1777 = vsel %vm344, %v1726, 0
  %v1780 = vsel %vm344, %v1727, 0
  %v1783 = vsel %vm344, %v1728, 0
  %v1786 = vsel %vm344, %v1729, 0
  %v1789 = vsel %vm344, %v1730, 0
  %v1792 = vsel %vm344, %v1731, 0
  %1794 = vmatprep.subr.bf16.mxu0 0
  %1795 = vmatpush1.bf16.msra.mxu0 %v1748
  %1796 = vmatprep.subr.bf16.mxu0 0
  %1797 = vmatpush1.bf16.msra.mxu0 %v1749
  %1798 = vmatprep.subr.bf16.mxu0 0
  %1799 = vmatpush1.bf16.msra.mxu0 0
  %1800 = vmatprep.subr.bf16.mxu0 0
  %1801 = vmatpush1.bf16.msra.mxu0 0
  %1802 = vmatprep.subr.bf16.mxu0 0
  %1803 = vmatpush1.bf16.msra.mxu0 0
  %1804 = vmatprep.subr.bf16.mxu0 0
  %1805 = vmatpush1.bf16.msra.mxu0 0
  %1806 = vmatprep.subr.bf16.mxu0 0
  %1807 = vmatpush1.bf16.msra.mxu0 0
  %1808 = vmatprep.subr.bf16.mxu0 0
  %1809 = vmatpush1.bf16.msra.mxu0 0
  %1810 = vmatprep.subr.bf16.mxu0 0
  %1811 = vmatpush1.bf16.msra.mxu0 0
  %1812 = vmatprep.subr.bf16.mxu0 0
  %1813 = vmatpush1.bf16.msra.mxu0 0
  %1814 = vmatprep.subr.bf16.mxu0 0
  %1815 = vmatpush1.bf16.msra.mxu0 0
  %1816 = vmatprep.subr.bf16.mxu0 0
  %1817 = vmatpush1.bf16.msra.mxu0 0
  %1818 = vmatprep.subr.bf16.mxu0 0
  %1819 = vmatpush1.bf16.msra.mxu0 0
  %1820 = vmatprep.subr.bf16.mxu0 0
  %1821 = vmatpush1.bf16.msra.mxu0 0
  %1822 = vmatprep.subr.bf16.mxu0 0
  %1823 = vmatpush1.bf16.msra.mxu0 0
  %1824 = vmatprep.subr.bf16.mxu0 0
  %1825 = vmatpush1.bf16.msra.mxu0 0
  %1826 = vmatprep.mubr.bf16.mxu0 0
  %1827 = vmatmul.mubr.bf16.gmra.mrb[0].mxu0 %v1753
  %v1828 = vpop.f32.mrb[0].mxu0
  %v1829 = vadd.f32 %v1739, %v1828
  %v1830 = vpop.f32.mrb[0].mxu0
  %v1831 = vpop.f32.mrb[0].mxu0
  %v1832 = vadd.f32 %v1739, %v1831
  %v1833 = vpop.f32.mrb[0].mxu0
  %1834 = vmatprep.mubr.bf16.mxu0 0
  %1835 = vmatmul.mubr.bf16.gmra.mrb[0].mxu0 %v1756
  %v1836 = vpop.f32.mrb[0].mxu0
  %v1837 = vadd.f32 %v1739, %v1836
  %v1838 = vpop.f32.mrb[0].mxu0
  %v1839 = vpop.f32.mrb[0].mxu0
  %v1840 = vadd.f32 %v1739, %v1839
  %v1841 = vpop.f32.mrb[0].mxu0
  %1842 = vmatprep.mubr.bf16.mxu0 0
  %1843 = vmatmul.mubr.bf16.gmra.mrb[0].mxu0 %v1759
  %v1844 = vpop.f32.mrb[0].mxu0
  %v1845 = vadd.f32 %v1739, %v1844
  %v1846 = vpop.f32.mrb[0].mxu0
  %v1847 = vpop.f32.mrb[0].mxu0
  %v1848 = vadd.f32 %v1739, %v1847
  %v1849 = vpop.f32.mrb[0].mxu0
  %1850 = vmatprep.mubr.bf16.mxu0 0
  %1851 = vmatmul.mubr.bf16.gmra.mrb[0].mxu0 %v1762
  %v1852 = vpop.f32.mrb[0].mxu0
  %v1853 = vadd.f32 %v1739, %v1852
  %v1854 = vpop.f32.mrb[0].mxu0
  %v1855 = vpop.f32.mrb[0].mxu0
  %v1856 = vadd.f32 %v1739, %v1855
  %v1857 = vpop.f32.mrb[0].mxu0
  %1858 = vmatprep.mubr.bf16.mxu0 0
  %1859 = vmatmul.mubr.bf16.gmra.mrb[0].mxu0 %v1765
  %v1860 = vpop.f32.mrb[0].mxu0
  %v1861 = vadd.f32 %v1739, %v1860
  %v1862 = vpop.f32.mrb[0].mxu0
  %v1863 = vpop.f32.mrb[0].mxu0
  %v1864 = vadd.f32 %v1739, %v1863
  %v1865 = vpop.f32.mrb[0].mxu0
  %1866 = vmatprep.mubr.bf16.mxu0 0
  %1867 = vmatmul.mubr.bf16.gmra.mrb[0].mxu0 %v1768
  %v1868 = vpop.f32.mrb[0].mxu0
  %v1869 = vadd.f32 %v1739, %v1868
  %v1870 = vpop.f32.mrb[0].mxu0
  %v1871 = vpop.f32.mrb[0].mxu0
  %v1872 = vadd.f32 %v1739, %v1871
  %v1873 = vpop.f32.mrb[0].mxu0
  %1874 = vmatprep.mubr.bf16.mxu0 0
  %1875 = vmatmul.mubr.bf16.gmra.mrb[0].mxu0 %v1771
  %v1876 = vpop.f32.mrb[0].mxu0
  %v1877 = vadd.f32 %v1739, %v1876
  %v1878 = vpop.f32.mrb[0].mxu0
  %v1879 = vpop.f32.mrb[0].mxu0
  %v1880 = vadd.f32 %v1739, %v1879
  %v1881 = vpop.f32.mrb[0].mxu0
  %1882 = vmatprep.mubr.bf16.mxu0 0
  %1883 = vmatmul.mubr.bf16.gmra.mrb[0].mxu0 %v1774
  %v1884 = vpop.f32.mrb[0].mxu0
  %v1885 = vadd.f32 %v1739, %v1884
  %v1886 = vpop.f32.mrb[0].mxu0
  %v1887 = vpop.f32.mrb[0].mxu0
  %v1888 = vadd.f32 %v1739, %v1887
  %v1889 = vpop.f32.mrb[0].mxu0
  %1890 = vmatprep.mubr.bf16.mxu0 0
  %1891 = vmatmul.mubr.bf16.gmra.mrb[0].mxu0 %v1777
  %v1892 = vpop.f32.mrb[0].mxu0
  %v1893 = vadd.f32 %v1739, %v1892
  %v1894 = vpop.f32.mrb[0].mxu0
  %v1895 = vpop.f32.mrb[0].mxu0
  %v1896 = vadd.f32 %v1739, %v1895
  %v1897 = vpop.f32.mrb[0].mxu0
  %1898 = vmatprep.mubr.bf16.mxu0 0
  %1899 = vmatmul.mubr.bf16.gmra.mrb[0].mxu0 %v1780
  %v1900 = vpop.f32.mrb[0].mxu0
  %v1901 = vadd.f32 %v1739, %v1900
  %v1902 = vpop.f32.mrb[0].mxu0
  %v1903 = vpop.f32.mrb[0].mxu0
  %v1904 = vadd.f32 %v1739, %v1903
  %v1905 = vpop.f32.mrb[0].mxu0
  %1906 = vmatprep.mubr.bf16.mxu0 0
  %1907 = vmatmul.mubr.bf16.gmra.mrb[0].mxu0 %v1783
  %v1908 = vpop.f32.mrb[0].mxu0
  %v1909 = vadd.f32 %v1739, %v1908
  %v1910 = vpop.f32.mrb[0].mxu0
  %v1911 = vpop.f32.mrb[0].mxu0
  %v1912 = vadd.f32 %v1739, %v1911
  %v1913 = vpop.f32.mrb[0].mxu0
  %1914 = vmatprep.mubr.bf16.mxu0 0
  %1915 = vmatmul.mubr.bf16.gmra.mrb[0].mxu0 %v1786
  %v1916 = vpop.f32.mrb[0].mxu0
  %v1917 = vadd.f32 %v1739, %v1916
  %v1918 = vpop.f32.mrb[0].mxu0
  %v1919 = vpop.f32.mrb[0].mxu0
  %v1920 = vadd.f32 %v1739, %v1919
  %v1921 = vpop.f32.mrb[0].mxu0
  %1922 = vmatprep.mubr.bf16.mxu0 0
  %1923 = vmatmul.mubr.bf16.gmra.mrb[0].mxu0 %v1789
  %v1924 = vpop.f32.mrb[0].mxu0
  %v1925 = vadd.f32 %v1739, %v1924
  %v1926 = vpop.f32.mrb[0].mxu0
  %v1927 = vpop.f32.mrb[0].mxu0
  %v1928 = vadd.f32 %v1739, %v1927
  %v1929 = vpop.f32.mrb[0].mxu0
  %1930 = vmatprep.mubr.bf16.mxu0 0
  %1931 = vmatmul.mubr.bf16.gmra.mrb[0].mxu0 %v1792
  %v1932 = vpop.f32.mrb[0].mxu0
  %v1933 = vadd.f32 %v1739, %v1932
  %v1934 = vpop.f32.mrb[0].mxu0
  %v1935 = vpop.f32.mrb[0].mxu0
  %v1936 = vpop.f32.mrb[0].mxu0
  %1937 = vdwg.mxu0
  %vm1938 = vcmp.lt.s32.totalorder %v1026, 124
  %v1939 = vsel %vm1938, %v1829, %v916
  %v1940 = vsel %vm1938, %v1832, %v919
  %v1941 = vsel %vm1938, %v1837, %v924
  %v1942 = vsel %vm1938, %v1840, %v927
  %v1943 = vsel %vm1938, %v1845, %v932
  %v1944 = vsel %vm1938, %v1848, %v935
  %v1945 = vsel %vm1938, %v1853, %v940
  %v1946 = vsel %vm1938, %v1856, %v943
  %v1947 = vsel %vm1938, %v1861, %v948
  %v1948 = vsel %vm1938, %v1864, %v951
  %v1949 = vsel %vm1938, %v1869, %v956
  %v1950 = vsel %vm1938, %v1872, %v959
  %v1951 = vsel %vm1938, %v1877, %v964
  %v1952 = vsel %vm1938, %v1880, %v967
  %v1953 = vsel %vm1938, %v1885, %v972
  %v1954 = vsel %vm1938, %v1888, %v975
  %v1955 = vsel %vm1938, %v1893, %v980
  %v1956 = vsel %vm1938, %v1896, %v983
  %v1957 = vsel %vm1938, %v1901, %v988
  %v1958 = vsel %vm1938, %v1904, %v991
  %v1959 = vsel %vm1938, %v1909, %v996
  %v1960 = vsel %vm1938, %v1912, %v999
  %v1961 = vsel %vm1938, %v1917, %v1004
  %v1962 = vsel %vm1938, %v1920, %v1007
  %v1963 = vsel %vm1938, %v1925, %v1012
  %v1964 = vsel %vm1938, %v1928, %v1015
  %v1965 = vsel %vm1938, %v1933, %v1020
  %1966 = vst [vmem:[%s10] sm:$0xff] %v1939
  %1967 = vst [vmem:[%s10 + $0x8] sm:$0xff] %v1940
  %1968 = vst [vmem:[%s10 + $0x10] sm:$0xff] %v1941
  %1969 = vst [vmem:[%s10 + $0x18] sm:$0xff] %v1942
  %1970 = vst [vmem:[%s10 + $0x20] sm:$0xff] %v1943
  %1971 = vst [vmem:[%s10 + $0x28] sm:$0xff] %v1944
  %1972 = vst [vmem:[%s10 + $0x30] sm:$0xff] %v1945
  %1973 = vst [vmem:[%s10 + $0x38] sm:$0xff] %v1946
  %1974 = vst [vmem:[%s10 + $0x40] sm:$0xff] %v1947
  %1975 = vst [vmem:[%s10 + $0x48] sm:$0xff] %v1948
  %1976 = vst [vmem:[%s10 + $0x50] sm:$0xff] %v1949
  %1977 = vst [vmem:[%s10 + $0x58] sm:$0xff] %v1950
  %1978 = vst [vmem:[%s10 + $0x60] sm:$0xff] %v1951
  %1979 = vst [vmem:[%s10 + $0x68] sm:$0xff] %v1952
  %1980 = vst [vmem:[%s10 + $0x70] sm:$0xff] %v1953
  %1981 = vst [vmem:[%s10 + $0x78] sm:$0xff] %v1954
  %1982 = vst [vmem:[%s10 + $0x80] sm:$0xff] %v1955
  %1983 = vst [vmem:[%s10 + $0x88] sm:$0xff] %v1956
  %1984 = vst [vmem:[%s10 + $0x90] sm:$0xff] %v1957
  %1985 = vst [vmem:[%s10 + $0x98] sm:$0xff] %v1958
  %1986 = vst [vmem:[%s10 + $0xa0] sm:$0xff] %v1959
  %1987 = vst [vmem:[%s10 + $0xa8] sm:$0xff] %v1960
  %1988 = vst [vmem:[%s10 + $0xb0] sm:$0xff] %v1961
  %1989 = vst [vmem:[%s10 + $0xb8] sm:$0xff] %v1962
  %1990 = vst [vmem:[%s10 + $0xc0] sm:$0xff] %v1963
  %1991 = vst [vmem:[%s10 + $0xc8] sm:$0xff] %v1964
  %1992 = vst [vmem:[%s10 + $0xd0] sm:$0x3f] %v1965
  // Predicated region
  $region42: #{vae_forward.1} parent=0 // pred_check
    _
  $region43: #{vae_forward.1} parent=0 // pred_check_branch
    %1994 = sbr.rel (0) target = $region45
  $region44: #{vae_forward.1} parent=0 // pred_region
    _
  $region45: #{vae_forward.1} parent=0 // pred_fallthru
    _
  // Predicated region
  $region46: #{vae_forward.1} parent=0 // pred_check
    _
  $region47: #{vae_forward.1} parent=0 // pred_check_branch
    %1996 = sbr.rel (0) target = $region49
  $region48: #{vae_forward.1} parent=0 // pred_region
    _
  $region49: #{vae_forward.1} parent=0 // pred_fallthru
    _

</llo_original>
